<compile_context>
chip_gen: v7x
topology: tpu7x:2x2x1
jax: 0.10.0
libtpu: 0.0.40
codegen_flags: <defaults>
</compile_context>

<pallas_src>
import jax
import jax.numpy as jnp
from jax.experimental import pallas as pl
from jax.experimental.pallas import tpu as pltpu


def _band_matrices(w_hwio, W):
    """Fold the (kw, ci)->co contraction of a 3x3 'same' conv into 3 dense
    (W*C, W*C) block-tridiagonal matrices (one per kh tap).

    A[kh, m, l] = w[kh, kw, ci, co]  with  m = w_in*C + ci, l = w_out*C + co,
    kw = w_in - w_out + 1, and 0 when kw is outside [0, 2] (this implements
    the zero padding of the width dimension for free).
    """
    C = w_hwio.shape[2]
    WC = W * C
    idx = jnp.arange(WC)
    pos, chan = idx // C, idx % C
    kw = pos[:, None] - pos[None, :] + 1                    # (WC, WC)
    valid = (kw >= 0) & (kw <= 2)
    kw_c = jnp.clip(kw, 0, 2)
    A = w_hwio[:, kw_c, chan[:, None], chan[None, :]]       # (3, WC, WC)
    return jnp.where(valid[None], A, 0.0).astype(jnp.float32)


def _make_group_kernel(n_resblocks, H, WC):
    n_layers = 2 * n_resblocks + 1

    def kernel(x_ref, a_ref, b_ref, o_ref, xpad_ref):
        # x_ref   : (1, H, WC)             input image, lane-dense layout
        # a_ref   : (3*n_layers, WC, WC)   band weight matrices (all layers)
        # b_ref   : (n_layers, 1, WC)      bias vectors (bias tiled over w)
        # o_ref   : (1, H, WC)             output image
        # xpad_ref: (H+2, WC) VMEM scratch -- H-halo zero-padded activation
        xpad_ref[...] = jnp.zeros_like(xpad_ref)   # halo rows stay 0 below
        x_in = x_ref[0].astype(jnp.float32)        # (H, WC)

        def conv(act, layer):
            # 3x3 "same" conv == 3 banded MXU matmuls over the padded H rows.
            xpad_ref[1:H + 1, :] = act
            acc = jnp.zeros((H, WC), jnp.float32)
            for kh in range(3):
                acc = acc + jnp.dot(xpad_ref[kh:kh + H, :],
                                    a_ref[3 * layer + kh],
                                    preferred_element_type=jnp.float32)
            return acc + b_ref[layer]

        res = x_in
        for blk in range(n_resblocks):
            h = jnp.maximum(conv(res, 2 * blk), 0.0)              # conv+ReLU
            res = res + jnp.float32(0.1) * conv(h, 2 * blk + 1)   # ResB skip
        res = conv(res, n_layers - 1) + x_in                      # tail + skip
        o_ref[0] = res.astype(o_ref.dtype)

    return kernel


def residual_group(x_nchw, params):
    """ResidualGroup forward (NCHW in / NCHW out, matching PyTorch)."""
    # TODO(synk): for real SR resolutions (large H, or W*C >> 128) strip-tile
    # the H axis with a (#fused-convs)-row halo, switch to an im2col
    # (H*W, 9C)x(9C, C) matmul instead of the (W*C)^2 band matrices, and cast
    # the matmul operands to bf16 on v6e/v7x (keep f32 accumulation/epilogue).
    N, C, H, W = x_nchw.shape
    WC = W * C
    n_resblocks = len(params["blocks"])
    n_layers = 2 * n_resblocks + 1

    # Lane-dense activation layout: (N, H, W*C).  Best when W*C % 128 == 0.
    x2d = jnp.transpose(x_nchw, (0, 2, 3, 1)).reshape(N, H, WC)

    ws, bs = [], []
    for (w1, b1, w2, b2) in params["blocks"]:
        ws += [w1, w2]
        bs += [b1, b2]
    ws.append(params["w_tail"])
    bs.append(params["b_tail"])
    A = jnp.concatenate([_band_matrices(w, W) for w in ws], axis=0)   # (3L,WC,WC)
    Bv = jnp.stack([jnp.tile(b, W).reshape(1, WC) for b in bs])       # (L,1,WC)

    kernel = _make_group_kernel(n_resblocks, H, WC)

    out2d = pl.pallas_call(
        kernel,
        out_shape=jax.ShapeDtypeStruct((N, H, WC), x_nchw.dtype),
        grid=(N,),
        in_specs=[
            pl.BlockSpec((1, H, WC), lambda n: (n, 0, 0)),
            pl.BlockSpec((3 * n_layers, WC, WC), lambda n: (0, 0, 0)),
            pl.BlockSpec((n_layers, 1, WC), lambda n: (0, 0, 0)),
        ],
        out_specs=pl.BlockSpec((1, H, WC), lambda n: (n, 0, 0)),
        scratch_shapes=[pltpu.VMEM((H + 2, WC), jnp.float32)],
        compiler_params=pltpu.CompilerParams(
            dimension_semantics=("parallel",)),
    )(x2d, A, Bv)

    return jnp.transpose(out2d.reshape(N, H, W, C), (0, 3, 1, 2))


# ------------------------- plain-JAX reference -------------------------

def _ref_conv3x3(x_nhwc, w, b):
    y = jax.lax.conv_general_dilated(
        x_nhwc, w, window_strides=(1, 1), padding="SAME",
        dimension_numbers=("NHWC", "HWIO", "NHWC"))
    return y + b


def residual_group_ref(x_nchw, params):
    x = jnp.transpose(x_nchw, (0, 2, 3, 1))
    res = x
    for (w1, b1, w2, b2) in params["blocks"]:
        h = jnp.maximum(_ref_conv3x3(res, w1, b1), 0.0)
        res = res + 0.1 * _ref_conv3x3(h, w2, b2)
    res = _ref_conv3x3(res, params["w_tail"], params["b_tail"]) + x
    return jnp.transpose(res, (0, 3, 1, 2))


# ------------------------------- main ----------------------------------

def init_params(key, n_feat, n_resblocks):
    blocks = []
    for _ in range(n_resblocks):
        key, k1, k2, k3, k4 = jax.random.split(key, 5)
        w1 = 0.1 * jax.random.normal(k1, (3, 3, n_feat, n_feat), jnp.float32)
        b1 = 0.1 * jax.random.normal(k2, (n_feat,), jnp.float32)
        w2 = 0.1 * jax.random.normal(k3, (3, 3, n_feat, n_feat), jnp.float32)
        b2 = 0.1 * jax.random.normal(k4, (n_feat,), jnp.float32)
        blocks.append((w1, b1, w2, b2))
    key, k5, k6 = jax.random.split(key, 3)
    w_tail = 0.1 * jax.random.normal(k5, (3, 3, n_feat, n_feat), jnp.float32)
    b_tail = 0.1 * jax.random.normal(k6, (n_feat,), jnp.float32)
    return {"blocks": blocks, "w_tail": w_tail, "b_tail": b_tail}


if __name__ == "__main__":
    N, C, H, W = 2, 8, 16, 16   # n_feat = 8 ; W*C = 128 (lane-dense)
    n_resblocks = 2

    key = jax.random.PRNGKey(0)
    key, kx = jax.random.split(key)
    x = jax.random.normal(kx, (N, C, H, W), jnp.float32)   # NCHW like PyTorch
    params = init_params(key, C, n_resblocks)

    out = jax.block_until_ready(residual_group(x, params))
    ref = residual_group_ref(x, params)

    assert out.shape == (N, C, H, W)
    assert jnp.allclose(out, ref, atol=1e-3, rtol=1e-3), \
        float(jnp.max(jnp.abs(out - ref)))

    print("KERNEL_OK")
</pallas_src>

<mosaic_0001>
module attributes {stable_mosaic.version = 11 : i64} {
  func.func @kernel(%arg0: i32, %arg1: memref<1x16x128xf32, #tpu.memory_space<vmem>>, %arg2: memref<15x128x128xf32, #tpu.memory_space<vmem>>, %arg3: memref<5x1x128xf32, #tpu.memory_space<vmem>>, %arg4: memref<1x16x128xf32, #tpu.memory_space<vmem>>, %arg5: memref<18x128xf32, #tpu.memory_space<vmem>>) attributes {dimension_semantics = [#tpu.dimension_semantics<parallel>], iteration_bounds = array<i64: 2>, scalar_prefetch = 0 : i64, scratch_operands = 1 : i64, tpu.core_type = #tpu.core_type<tc>, window_params = [{transform_indices = @transform_0, window_bounds = array<i64: 1, 16, 128>}, {pipeline_mode = #tpu.pipeline_mode<synchronous>, transform_indices = @transform_1, window_bounds = array<i64: 15, 128, 128>}, {pipeline_mode = #tpu.pipeline_mode<synchronous>, transform_indices = @transform_2, window_bounds = array<i64: 5, 1, 128>}, {transform_indices = @transform_3, window_bounds = array<i64: 1, 16, 128>}]} {
    %cst = arith.constant 0.000000e+00 : f32
    %0 = vector.broadcast %cst : f32 to vector<18x128xf32>
    %c0 = arith.constant 0 : index
    %c0_0 = arith.constant 0 : index
    %1 = vector.load %arg5[%c0, %c0_0] : memref<18x128xf32, #tpu.memory_space<vmem>>, vector<18x128xf32>
    tpu.vector_store %arg5[%c0, %c0_0], %0 {strides = array<i32>} : memref<18x128xf32, #tpu.memory_space<vmem>>, vector<18x128xf32>,
    %c0_1 = arith.constant 0 : index
    %c0_2 = arith.constant 0 : index
    %c0_3 = arith.constant 0 : index
    %2 = vector.load %arg1[%c0_1, %c0_2, %c0_3] : memref<1x16x128xf32, #tpu.memory_space<vmem>>, vector<1x16x128xf32>
    %3 = vector.shape_cast %2 : vector<1x16x128xf32> to vector<16x128xf32>
    %c1 = arith.constant 1 : index
    %c0_4 = arith.constant 0 : index
    %4 = vector.load %arg5[%c1, %c0_4] : memref<18x128xf32, #tpu.memory_space<vmem>>, vector<16x128xf32>
    tpu.vector_store %arg5[%c1, %c0_4], %3 {strides = array<i32>} : memref<18x128xf32, #tpu.memory_space<vmem>>, vector<16x128xf32>,
    %cst_5 = arith.constant 0.000000e+00 : f32
    %5 = vector.broadcast %cst_5 : f32 to vector<16x128xf32>
    %c0_6 = arith.constant 0 : index
    %c0_7 = arith.constant 0 : index
    %6 = vector.load %arg5[%c0_6, %c0_7] : memref<18x128xf32, #tpu.memory_space<vmem>>, vector<16x128xf32>
    %c0_8 = arith.constant 0 : index
    %c0_9 = arith.constant 0 : index
    %c0_10 = arith.constant 0 : index
    %7 = vector.load %arg2[%c0_8, %c0_9, %c0_10] : memref<15x128x128xf32, #tpu.memory_space<vmem>>, vector<1x128x128xf32>
    %8 = vector.shape_cast %7 : vector<1x128x128xf32> to vector<128x128xf32>
    %cst_11 = arith.constant dense<0.000000e+00> : vector<16x128xf32>
    %9 = tpu.matmul %6, %8, %cst_11 {dimension_numbers = #tpu.dot_dimension_numbers<[1], [0], [0], [1], [0, 0, 1, 1], [], []>} : vector<16x128xf32>, vector<128x128xf32>, vector<16x128xf32> -> vector<16x128xf32>
    %10 = arith.addf %5, %9 : vector<16x128xf32>
    %c1_12 = arith.constant 1 : index
    %c0_13 = arith.constant 0 : index
    %11 = vector.load %arg5[%c1_12, %c0_13] : memref<18x128xf32, #tpu.memory_space<vmem>>, vector<16x128xf32>
    %c1_14 = arith.constant 1 : index
    %c0_15 = arith.constant 0 : index
    %c0_16 = arith.constant 0 : index
    %12 = vector.load %arg2[%c1_14, %c0_15, %c0_16] : memref<15x128x128xf32, #tpu.memory_space<vmem>>, vector<1x128x128xf32>
    %13 = vector.shape_cast %12 : vector<1x128x128xf32> to vector<128x128xf32>
    %cst_17 = arith.constant dense<0.000000e+00> : vector<16x128xf32>
    %14 = tpu.matmul %11, %13, %cst_17 {dimension_numbers = #tpu.dot_dimension_numbers<[1], [0], [0], [1], [0, 0, 1, 1], [], []>} : vector<16x128xf32>, vector<128x128xf32>, vector<16x128xf32> -> vector<16x128xf32>
    %15 = arith.addf %10, %14 : vector<16x128xf32>
    %c2 = arith.constant 2 : index
    %c0_18 = arith.constant 0 : index
    %16 = vector.load %arg5[%c2, %c0_18] : memref<18x128xf32, #tpu.memory_space<vmem>>, vector<16x128xf32>
    %c2_19 = arith.constant 2 : index
    %c0_20 = arith.constant 0 : index
    %c0_21 = arith.constant 0 : index
    %17 = vector.load %arg2[%c2_19, %c0_20, %c0_21] : memref<15x128x128xf32, #tpu.memory_space<vmem>>, vector<1x128x128xf32>
    %18 = vector.shape_cast %17 : vector<1x128x128xf32> to vector<128x128xf32>
    %cst_22 = arith.constant dense<0.000000e+00> : vector<16x128xf32>
    %19 = tpu.matmul %16, %18, %cst_22 {dimension_numbers = #tpu.dot_dimension_numbers<[1], [0], [0], [1], [0, 0, 1, 1], [], []>} : vector<16x128xf32>, vector<128x128xf32>, vector<16x128xf32> -> vector<16x128xf32>
    %20 = arith.addf %15, %19 : vector<16x128xf32>
    %c0_23 = arith.constant 0 : index
    %c0_24 = arith.constant 0 : index
    %c0_25 = arith.constant 0 : index
    %21 = vector.load %arg3[%c0_23, %c0_24, %c0_25] : memref<5x1x128xf32, #tpu.memory_space<vmem>>, vector<1x1x128xf32>
    %22 = vector.shape_cast %21 : vector<1x1x128xf32> to vector<1x128xf32>
    %23 = vector.broadcast %22 : vector<1x128xf32> to vector<16x128xf32>
    %24 = arith.addf %20, %23 : vector<16x128xf32>
    %cst_26 = arith.constant 0.000000e+00 : f32
    %25 = vector.broadcast %cst_26 : f32 to vector<16x128xf32>
    %26 = arith.maximumf %24, %25 : vector<16x128xf32>
    %c1_27 = arith.constant 1 : index
    %c0_28 = arith.constant 0 : index
    %27 = vector.load %arg5[%c1_27, %c0_28] : memref<18x128xf32, #tpu.memory_space<vmem>>, vector<16x128xf32>
    tpu.vector_store %arg5[%c1_27, %c0_28], %26 {strides = array<i32>} : memref<18x128xf32, #tpu.memory_space<vmem>>, vector<16x128xf32>,
    %cst_29 = arith.constant 0.000000e+00 : f32
    %28 = vector.broadcast %cst_29 : f32 to vector<16x128xf32>
    %c0_30 = arith.constant 0 : index
    %c0_31 = arith.constant 0 : index
    %29 = vector.load %arg5[%c0_30, %c0_31] : memref<18x128xf32, #tpu.memory_space<vmem>>, vector<16x128xf32>
    %c3 = arith.constant 3 : index
    %c0_32 = arith.constant 0 : index
    %c0_33 = arith.constant 0 : index
    %30 = vector.load %arg2[%c3, %c0_32, %c0_33] : memref<15x128x128xf32, #tpu.memory_space<vmem>>, vector<1x128x128xf32>
    %31 = vector.shape_cast %30 : vector<1x128x128xf32> to vector<128x128xf32>
    %cst_34 = arith.constant dense<0.000000e+00> : vector<16x128xf32>
    %32 = tpu.matmul %29, %31, %cst_34 {dimension_numbers = #tpu.dot_dimension_numbers<[1], [0], [0], [1], [0, 0, 1, 1], [], []>} : vector<16x128xf32>, vector<128x128xf32>, vector<16x128xf32> -> vector<16x128xf32>
    %33 = arith.addf %28, %32 : vector<16x128xf32>
    %c1_35 = arith.constant 1 : index
    %c0_36 = arith.constant 0 : index
    %34 = vector.load %arg5[%c1_35, %c0_36] : memref<18x128xf32, #tpu.memory_space<vmem>>, vector<16x128xf32>
    %c4 = arith.constant 4 : index
    %c0_37 = arith.constant 0 : index
    %c0_38 = arith.constant 0 : index
    %35 = vector.load %arg2[%c4, %c0_37, %c0_38] : memref<15x128x128xf32, #tpu.memory_space<vmem>>, vector<1x128x128xf32>
    %36 = vector.shape_cast %35 : vector<1x128x128xf32> to vector<128x128xf32>
    %cst_39 = arith.constant dense<0.000000e+00> : vector<16x128xf32>
    %37 = tpu.matmul %34, %36, %cst_39 {dimension_numbers = #tpu.dot_dimension_numbers<[1], [0], [0], [1], [0, 0, 1, 1], [], []>} : vector<16x128xf32>, vector<128x128xf32>, vector<16x128xf32> -> vector<16x128xf32>
    %38 = arith.addf %33, %37 : vector<16x128xf32>
    %c2_40 = arith.constant 2 : index
    %c0_41 = arith.constant 0 : index
    %39 = vector.load %arg5[%c2_40, %c0_41] : memref<18x128xf32, #tpu.memory_space<vmem>>, vector<16x128xf32>
    %c5 = arith.constant 5 : index
    %c0_42 = arith.constant 0 : index
    %c0_43 = arith.constant 0 : index
    %40 = vector.load %arg2[%c5, %c0_42, %c0_43] : memref<15x128x128xf32, #tpu.memory_space<vmem>>, vector<1x128x128xf32>
    %41 = vector.shape_cast %40 : vector<1x128x128xf32> to vector<128x128xf32>
    %cst_44 = arith.constant dense<0.000000e+00> : vector<16x128xf32>
    %42 = tpu.matmul %39, %41, %cst_44 {dimension_numbers = #tpu.dot_dimension_numbers<[1], [0], [0], [1], [0, 0, 1, 1], [], []>} : vector<16x128xf32>, vector<128x128xf32>, vector<16x128xf32> -> vector<16x128xf32>
    %43 = arith.addf %38, %42 : vector<16x128xf32>
    %c1_45 = arith.constant 1 : index
    %c0_46 = arith.constant 0 : index
    %c0_47 = arith.constant 0 : index
    %44 = vector.load %arg3[%c1_45, %c0_46, %c0_47] : memref<5x1x128xf32, #tpu.memory_space<vmem>>, vector<1x1x128xf32>
    %45 = vector.shape_cast %44 : vector<1x1x128xf32> to vector<1x128xf32>
    %46 = vector.broadcast %45 : vector<1x128xf32> to vector<16x128xf32>
    %47 = arith.addf %43, %46 : vector<16x128xf32>
    %cst_48 = arith.constant 1.000000e-01 : f32
    %48 = vector.broadcast %cst_48 : f32 to vector<16x128xf32>
    %49 = arith.mulf %48, %47 : vector<16x128xf32>
    %50 = arith.addf %3, %49 : vector<16x128xf32>
    %c1_49 = arith.constant 1 : index
    %c0_50 = arith.constant 0 : index
    %51 = vector.load %arg5[%c1_49, %c0_50] : memref<18x128xf32, #tpu.memory_space<vmem>>, vector<16x128xf32>
    tpu.vector_store %arg5[%c1_49, %c0_50], %50 {strides = array<i32>} : memref<18x128xf32, #tpu.memory_space<vmem>>, vector<16x128xf32>,
    %cst_51 = arith.constant 0.000000e+00 : f32
    %52 = vector.broadcast %cst_51 : f32 to vector<16x128xf32>
    %c0_52 = arith.constant 0 : index
    %c0_53 = arith.constant 0 : index
    %53 = vector.load %arg5[%c0_52, %c0_53] : memref<18x128xf32, #tpu.memory_space<vmem>>, vector<16x128xf32>
    %c6 = arith.constant 6 : index
    %c0_54 = arith.constant 0 : index
    %c0_55 = arith.constant 0 : index
    %54 = vector.load %arg2[%c6, %c0_54, %c0_55] : memref<15x128x128xf32, #tpu.memory_space<vmem>>, vector<1x128x128xf32>
    %55 = vector.shape_cast %54 : vector<1x128x128xf32> to vector<128x128xf32>
    %cst_56 = arith.constant dense<0.000000e+00> : vector<16x128xf32>
    %56 = tpu.matmul %53, %55, %cst_56 {dimension_numbers = #tpu.dot_dimension_numbers<[1], [0], [0], [1], [0, 0, 1, 1], [], []>} : vector<16x128xf32>, vector<128x128xf32>, vector<16x128xf32> -> vector<16x128xf32>
    %57 = arith.addf %52, %56 : vector<16x128xf32>
    %c1_57 = arith.constant 1 : index
    %c0_58 = arith.constant 0 : index
    %58 = vector.load %arg5[%c1_57, %c0_58] : memref<18x128xf32, #tpu.memory_space<vmem>>, vector<16x128xf32>
    %c7 = arith.constant 7 : index
    %c0_59 = arith.constant 0 : index
    %c0_60 = arith.constant 0 : index
    %59 = vector.load %arg2[%c7, %c0_59, %c0_60] : memref<15x128x128xf32, #tpu.memory_space<vmem>>, vector<1x128x128xf32>
    %60 = vector.shape_cast %59 : vector<1x128x128xf32> to vector<128x128xf32>
    %cst_61 = arith.constant dense<0.000000e+00> : vector<16x128xf32>
    %61 = tpu.matmul %58, %60, %cst_61 {dimension_numbers = #tpu.dot_dimension_numbers<[1], [0], [0], [1], [0, 0, 1, 1], [], []>} : vector<16x128xf32>, vector<128x128xf32>, vector<16x128xf32> -> vector<16x128xf32>
    %62 = arith.addf %57, %61 : vector<16x128xf32>
    %c2_62 = arith.constant 2 : index
    %c0_63 = arith.constant 0 : index
    %63 = vector.load %arg5[%c2_62, %c0_63] : memref<18x128xf32, #tpu.memory_space<vmem>>, vector<16x128xf32>
    %c8 = arith.constant 8 : index
    %c0_64 = arith.constant 0 : index
    %c0_65 = arith.constant 0 : index
    %64 = vector.load %arg2[%c8, %c0_64, %c0_65] : memref<15x128x128xf32, #tpu.memory_space<vmem>>, vector<1x128x128xf32>
    %65 = vector.shape_cast %64 : vector<1x128x128xf32> to vector<128x128xf32>
    %cst_66 = arith.constant dense<0.000000e+00> : vector<16x128xf32>
    %66 = tpu.matmul %63, %65, %cst_66 {dimension_numbers = #tpu.dot_dimension_numbers<[1], [0], [0], [1], [0, 0, 1, 1], [], []>} : vector<16x128xf32>, vector<128x128xf32>, vector<16x128xf32> -> vector<16x128xf32>
    %67 = arith.addf %62, %66 : vector<16x128xf32>
    %c2_67 = arith.constant 2 : index
    %c0_68 = arith.constant 0 : index
    %c0_69 = arith.constant 0 : index
    %68 = vector.load %arg3[%c2_67, %c0_68, %c0_69] : memref<5x1x128xf32, #tpu.memory_space<vmem>>, vector<1x1x128xf32>
    %69 = vector.shape_cast %68 : vector<1x1x128xf32> to vector<1x128xf32>
    %70 = vector.broadcast %69 : vector<1x128xf32> to vector<16x128xf32>
    %71 = arith.addf %67, %70 : vector<16x128xf32>
    %cst_70 = arith.constant 0.000000e+00 : f32
    %72 = vector.broadcast %cst_70 : f32 to vector<16x128xf32>
    %73 = arith.maximumf %71, %72 : vector<16x128xf32>
    %c1_71 = arith.constant 1 : index
    %c0_72 = arith.constant 0 : index
    %74 = vector.load %arg5[%c1_71, %c0_72] : memref<18x128xf32, #tpu.memory_space<vmem>>, vector<16x128xf32>
    tpu.vector_store %arg5[%c1_71, %c0_72], %73 {strides = array<i32>} : memref<18x128xf32, #tpu.memory_space<vmem>>, vector<16x128xf32>,
    %cst_73 = arith.constant 0.000000e+00 : f32
    %75 = vector.broadcast %cst_73 : f32 to vector<16x128xf32>
    %c0_74 = arith.constant 0 : index
    %c0_75 = arith.constant 0 : index
    %76 = vector.load %arg5[%c0_74, %c0_75] : memref<18x128xf32, #tpu.memory_space<vmem>>, vector<16x128xf32>
    %c9 = arith.constant 9 : index
    %c0_76 = arith.constant 0 : index
    %c0_77 = arith.constant 0 : index
    %77 = vector.load %arg2[%c9, %c0_76, %c0_77] : memref<15x128x128xf32, #tpu.memory_space<vmem>>, vector<1x128x128xf32>
    %78 = vector.shape_cast %77 : vector<1x128x128xf32> to vector<128x128xf32>
    %cst_78 = arith.constant dense<0.000000e+00> : vector<16x128xf32>
    %79 = tpu.matmul %76, %78, %cst_78 {dimension_numbers = #tpu.dot_dimension_numbers<[1], [0], [0], [1], [0, 0, 1, 1], [], []>} : vector<16x128xf32>, vector<128x128xf32>, vector<16x128xf32> -> vector<16x128xf32>
    %80 = arith.addf %75, %79 : vector<16x128xf32>
    %c1_79 = arith.constant 1 : index
    %c0_80 = arith.constant 0 : index
    %81 = vector.load %arg5[%c1_79, %c0_80] : memref<18x128xf32, #tpu.memory_space<vmem>>, vector<16x128xf32>
    %c10 = arith.constant 10 : index
    %c0_81 = arith.constant 0 : index
    %c0_82 = arith.constant 0 : index
    %82 = vector.load %arg2[%c10, %c0_81, %c0_82] : memref<15x128x128xf32, #tpu.memory_space<vmem>>, vector<1x128x128xf32>
    %83 = vector.shape_cast %82 : vector<1x128x128xf32> to vector<128x128xf32>
    %cst_83 = arith.constant dense<0.000000e+00> : vector<16x128xf32>
    %84 = tpu.matmul %81, %83, %cst_83 {dimension_numbers = #tpu.dot_dimension_numbers<[1], [0], [0], [1], [0, 0, 1, 1], [], []>} : vector<16x128xf32>, vector<128x128xf32>, vector<16x128xf32> -> vector<16x128xf32>
    %85 = arith.addf %80, %84 : vector<16x128xf32>
    %c2_84 = arith.constant 2 : index
    %c0_85 = arith.constant 0 : index
    %86 = vector.load %arg5[%c2_84, %c0_85] : memref<18x128xf32, #tpu.memory_space<vmem>>, vector<16x128xf32>
    %c11 = arith.constant 11 : index
    %c0_86 = arith.constant 0 : index
    %c0_87 = arith.constant 0 : index
    %87 = vector.load %arg2[%c11, %c0_86, %c0_87] : memref<15x128x128xf32, #tpu.memory_space<vmem>>, vector<1x128x128xf32>
    %88 = vector.shape_cast %87 : vector<1x128x128xf32> to vector<128x128xf32>
    %cst_88 = arith.constant dense<0.000000e+00> : vector<16x128xf32>
    %89 = tpu.matmul %86, %88, %cst_88 {dimension_numbers = #tpu.dot_dimension_numbers<[1], [0], [0], [1], [0, 0, 1, 1], [], []>} : vector<16x128xf32>, vector<128x128xf32>, vector<16x128xf32> -> vector<16x128xf32>
    %90 = arith.addf %85, %89 : vector<16x128xf32>
    %c3_89 = arith.constant 3 : index
    %c0_90 = arith.constant 0 : index
    %c0_91 = arith.constant 0 : index
    %91 = vector.load %arg3[%c3_89, %c0_90, %c0_91] : memref<5x1x128xf32, #tpu.memory_space<vmem>>, vector<1x1x128xf32>
    %92 = vector.shape_cast %91 : vector<1x1x128xf32> to vector<1x128xf32>
    %93 = vector.broadcast %92 : vector<1x128xf32> to vector<16x128xf32>
    %94 = arith.addf %90, %93 : vector<16x128xf32>
    %cst_92 = arith.constant 1.000000e-01 : f32
    %95 = vector.broadcast %cst_92 : f32 to vector<16x128xf32>
    %96 = arith.mulf %95, %94 : vector<16x128xf32>
    %97 = arith.addf %50, %96 : vector<16x128xf32>
    %c1_93 = arith.constant 1 : index
    %c0_94 = arith.constant 0 : index
    %98 = vector.load %arg5[%c1_93, %c0_94] : memref<18x128xf32, #tpu.memory_space<vmem>>, vector<16x128xf32>
    tpu.vector_store %arg5[%c1_93, %c0_94], %97 {strides = array<i32>} : memref<18x128xf32, #tpu.memory_space<vmem>>, vector<16x128xf32>,
    %cst_95 = arith.constant 0.000000e+00 : f32
    %99 = vector.broadcast %cst_95 : f32 to vector<16x128xf32>
    %c0_96 = arith.constant 0 : index
    %c0_97 = arith.constant 0 : index
    %100 = vector.load %arg5[%c0_96, %c0_97] : memref<18x128xf32, #tpu.memory_space<vmem>>, vector<16x128xf32>
    %c12 = arith.constant 12 : index
    %c0_98 = arith.constant 0 : index
    %c0_99 = arith.constant 0 : index
    %101 = vector.load %arg2[%c12, %c0_98, %c0_99] : memref<15x128x128xf32, #tpu.memory_space<vmem>>, vector<1x128x128xf32>
    %102 = vector.shape_cast %101 : vector<1x128x128xf32> to vector<128x128xf32>
    %cst_100 = arith.constant dense<0.000000e+00> : vector<16x128xf32>
    %103 = tpu.matmul %100, %102, %cst_100 {dimension_numbers = #tpu.dot_dimension_numbers<[1], [0], [0], [1], [0, 0, 1, 1], [], []>} : vector<16x128xf32>, vector<128x128xf32>, vector<16x128xf32> -> vector<16x128xf32>
    %104 = arith.addf %99, %103 : vector<16x128xf32>
    %c1_101 = arith.constant 1 : index
    %c0_102 = arith.constant 0 : index
    %105 = vector.load %arg5[%c1_101, %c0_102] : memref<18x128xf32, #tpu.memory_space<vmem>>, vector<16x128xf32>
    %c13 = arith.constant 13 : index
    %c0_103 = arith.constant 0 : index
    %c0_104 = arith.constant 0 : index
    %106 = vector.load %arg2[%c13, %c0_103, %c0_104] : memref<15x128x128xf32, #tpu.memory_space<vmem>>, vector<1x128x128xf32>
    %107 = vector.shape_cast %106 : vector<1x128x128xf32> to vector<128x128xf32>
    %cst_105 = arith.constant dense<0.000000e+00> : vector<16x128xf32>
    %108 = tpu.matmul %105, %107, %cst_105 {dimension_numbers = #tpu.dot_dimension_numbers<[1], [0], [0], [1], [0, 0, 1, 1], [], []>} : vector<16x128xf32>, vector<128x128xf32>, vector<16x128xf32> -> vector<16x128xf32>
    %109 = arith.addf %104, %108 : vector<16x128xf32>
    %c2_106 = arith.constant 2 : index
    %c0_107 = arith.constant 0 : index
    %110 = vector.load %arg5[%c2_106, %c0_107] : memref<18x128xf32, #tpu.memory_space<vmem>>, vector<16x128xf32>
    %c14 = arith.constant 14 : index
    %c0_108 = arith.constant 0 : index
    %c0_109 = arith.constant 0 : index
    %111 = vector.load %arg2[%c14, %c0_108, %c0_109] : memref<15x128x128xf32, #tpu.memory_space<vmem>>, vector<1x128x128xf32>
    %112 = vector.shape_cast %111 : vector<1x128x128xf32> to vector<128x128xf32>
    %cst_110 = arith.constant dense<0.000000e+00> : vector<16x128xf32>
    %113 = tpu.matmul %110, %112, %cst_110 {dimension_numbers = #tpu.dot_dimension_numbers<[1], [0], [0], [1], [0, 0, 1, 1], [], []>} : vector<16x128xf32>, vector<128x128xf32>, vector<16x128xf32> -> vector<16x128xf32>
    %114 = arith.addf %109, %113 : vector<16x128xf32>
    %c4_111 = arith.constant 4 : index
    %c0_112 = arith.constant 0 : index
    %c0_113 = arith.constant 0 : index
    %115 = vector.load %arg3[%c4_111, %c0_112, %c0_113] : memref<5x1x128xf32, #tpu.memory_space<vmem>>, vector<1x1x128xf32>
    %116 = vector.shape_cast %115 : vector<1x1x128xf32> to vector<1x128xf32>
    %117 = vector.broadcast %116 : vector<1x128xf32> to vector<16x128xf32>
    %118 = arith.addf %114, %117 : vector<16x128xf32>
    %119 = arith.addf %118, %3 : vector<16x128xf32>
    %c0_114 = arith.constant 0 : index
    %c0_115 = arith.constant 0 : index
    %c0_116 = arith.constant 0 : index
    %120 = vector.load %arg4[%c0_114, %c0_115, %c0_116] : memref<1x16x128xf32, #tpu.memory_space<vmem>>, vector<1x16x128xf32>
    %121 = vector.shape_cast %120 : vector<1x16x128xf32> to vector<16x128xf32>
    %122 = vector.shape_cast %119 : vector<16x128xf32> to vector<1x16x128xf32>
    tpu.vector_store %arg4[%c0_114, %c0_115, %c0_116], %122 {strides = array<i32>} : memref<1x16x128xf32, #tpu.memory_space<vmem>>, vector<1x16x128xf32>,
    return
  }
  func.func @transform_0(%arg0: i32) -> (i32, i32, i32) {
    %c0_i32 = arith.constant 0 : i32
    %c0_i32_0 = arith.constant 0 : i32
    %c0_i32_1 = arith.constant 0 : i32
    return %arg0, %c0_i32, %c0_i32_0 : i32, i32, i32
  }
  func.func @transform_1(%arg0: i32) -> (i32, i32, i32) {
    %c0_i32 = arith.constant 0 : i32
    %c0_i32_0 = arith.constant 0 : i32
    %c0_i32_1 = arith.constant 0 : i32
    %c0_i32_2 = arith.constant 0 : i32
    return %c0_i32, %c0_i32_0, %c0_i32_1 : i32, i32, i32
  }
  func.func @transform_2(%arg0: i32) -> (i32, i32, i32) {
    %c0_i32 = arith.constant 0 : i32
    %c0_i32_0 = arith.constant 0 : i32
    %c0_i32_1 = arith.constant 0 : i32
    %c0_i32_2 = arith.constant 0 : i32
    return %c0_i32, %c0_i32_0, %c0_i32_1 : i32, i32, i32
  }
  func.func @transform_3(%arg0: i32) -> (i32, i32, i32) {
    %c0_i32 = arith.constant 0 : i32
    %c0_i32_0 = arith.constant 0 : i32
    %c0_i32_1 = arith.constant 0 : i32
    return %arg0, %c0_i32, %c0_i32_0 : i32, i32, i32
  }
}

</mosaic_0001>

<llo_original>
// kernel: tpu_custom_call.1
$region0: #{tpu_custom_call.1}
  #allocation0 [shape = 'u32[]', space=smem, size = 0x4, offset = 0x4, fixed_abs, tag = 'smem constant byte address 0x4 - core index']
  #allocation1 [shape = 'u32[144,128]{1,0:T(1,128)}', space=vmem, size = 0x12000, scoped, tag = 'internal scratch']
  #allocation2 [shape = 'f32[18,128]{1,0:T(8,128)}', space=vmem, size = 0x3000, scoped, tag = 'scratch operand']
  %s0 = inlined_call_operand.hbm [shape: f32[2,16,128], index: 0, kind: input, shape index: {}]
  %s1 = inlined_call_operand.hbm [shape: f32[15,128,128], index: 1, kind: input, shape index: {}]
  %s2 = inlined_call_operand.vmem [shape: f32[5,1,128], index: 2, kind: input, shape index: {}]
  %s3 = inlined_call_operand.hbm [shape: f32[2,16,128], index: 3, kind: output, shape index: {}]
  %s4 = sld [smem:[#allocation0]]
  $region53: #{tpu_custom_call.1} parent=0
    _
  %s6 = ssub.s32 1, %s4
  %s7 = scalar_select 0, %s6, %s4
  $region1: #{tpu_custom_call.1} parent=0
    #allocation3 [shape = 'u8[16384]{0}', space=vmem, size = 0x4000, scoped, tag = 'input window, operand 0']
    #allocation4 [shape = 's32[2]{0}', space=sflag, size = 0x8, scoped, tag = 'scoped memory for tpu_custom_call.1']
    #allocation5 [shape = 's32[2]{0}', space=sflag, size = 0x8, scoped, tag = 'scoped memory for tpu_custom_call.1']
    #allocation6 [shape = 'u8[983040]{0}', space=vmem, size = 0xf0000, scoped, tag = 'input window, operand 1, single buffered']
    #allocation7 [shape = 's32[1]{0}', space=sflag, size = 0x4, scoped, tag = 'scoped memory for tpu_custom_call.1']
    #allocation8 [shape = 'u8[16384]{0}', space=vmem, size = 0x4000, scoped, tag = 'output window, operand 0']
    %8 = vsyncpa [#allocation4], 0
    %s9 = scalar_lea.sflag [#allocation4], 1
    %10 = vsyncpa %s9, 0
    %11 = vsyncpa [#allocation7], 0
    %12 = vsyncpa [#allocation5], 0
    %s13 = scalar_lea.sflag [#allocation5], 1
    %14 = vsyncpa %s13, 0
    loop: start=0, step=1, limit=4
    $region2: #{tpu_custom_call.1} parent=1 // loop_pre_header
      _
    $region3: #{tpu_custom_call.1} parent=1 // loop_header
      %s16 = sphi 0, %s20
      %p17 = scmp.ge.s32.totalorder %s16, 4
      %s26 = sphi 0, %s28
      %s29 = sphi 0, %s26
      %s30 = sphi 0, %s29
      %s46 = sphi 0, %s30
      %s50 = sphi 0, %s50
      %s52 = sphi 0, %s50
      %s53 = sphi 0, %s52
      %s67 = sphi 0, %s53
      %s71 = sphi 0, %s71
      %s73 = sphi 0, %s71
      %s74 = sphi 0, %s73
      %s88 = sphi 0, %s74
      %s94 = sphi 0, %s96
      %s97 = sphi 0, %s94
      %s98 = sphi 0, %s97
      %s114 = sphi 0, %s98
    $region4: #{tpu_custom_call.1} parent=1 // loop_header_branch
      %19 = sbr.rel (%p17) target = $region8
    $region5: #{tpu_custom_call.1} parent=1 // loop_body
      %s21 = ssub.s32 %s16, 1
      %s22 = ssub.s32 %s16, 2
      %s23 = sadd.s32 %s16, 1
      %s24 = ssub.s32 %s16, %s23
      %p25 = scmp.eq.s32.totalorder %s24, 0
      %s27 = sadd.s32 %s26, 1
      %s28 = scalar_select %p25, %s26, %s27
      %p31 = pneg %p25
      %p32 = scmp.eq.s32.totalorder %s16, 1
      %p33 = por %p31, %p32
      %p34 = scmp.ne.s32.totalorder %s26, %s29
      %p35 = scmp.eq.s32.totalorder %s16, 0
      %p36 = por %p34, %p35
      %p37 = scmp.ne.s32.totalorder %s26, %s29
      %p38 = scmp.eq.s32.totalorder %s21, 1
      %p39 = por %p37, %p38
      %p40 = scmp.ne.s32.totalorder %s29, %s30
      %p41 = scmp.eq.s32.totalorder %s21, 0
      %p42 = por %p40, %p41
      %p43 = scmp.ne.s32.totalorder %s29, %s30
      %p44 = scmp.eq.s32.totalorder %s22, 1
      %p45 = por %p43, %p44
      %p47 = scmp.ne.s32.totalorder %s30, %s46
      %p48 = scmp.eq.s32.totalorder %s22, 0
      %p49 = por %p47, %p48
      %s51 = sadd.s32 %s50, 1
      %p54 = scmp.eq.s32.totalorder %s16, 1
      %p55 = scmp.ne.s32.totalorder %s50, %s52
      %p56 = scmp.eq.s32.totalorder %s16, 0
      %p57 = por %p55, %p56
      %p58 = scmp.ne.s32.totalorder %s50, %s52
      %p59 = scmp.eq.s32.totalorder %s21, 1
      %p60 = por %p58, %p59
      %p61 = scmp.ne.s32.totalorder %s52, %s53
      %p62 = scmp.eq.s32.totalorder %s21, 0
      %p63 = por %p61, %p62
      %p64 = scmp.ne.s32.totalorder %s52, %s53
      %p65 = scmp.eq.s32.totalorder %s22, 1
      %p66 = por %p64, %p65
      %p68 = scmp.ne.s32.totalorder %s53, %s67
      %p69 = scmp.eq.s32.totalorder %s22, 0
      %p70 = por %p68, %p69
      %s72 = sadd.s32 %s71, 1
      %p75 = scmp.eq.s32.totalorder %s16, 1
      %p76 = scmp.ne.s32.totalorder %s71, %s73
      %p77 = scmp.eq.s32.totalorder %s16, 0
      %p78 = por %p76, %p77
      %p79 = scmp.ne.s32.totalorder %s71, %s73
      %p80 = scmp.eq.s32.totalorder %s21, 1
      %p81 = por %p79, %p80
      %p82 = scmp.ne.s32.totalorder %s73, %s74
      %p83 = scmp.eq.s32.totalorder %s21, 0
      %p84 = por %p82, %p83
      %p85 = scmp.ne.s32.totalorder %s73, %s74
      %p86 = scmp.eq.s32.totalorder %s22, 1
      %p87 = por %p85, %p86
      %p89 = scmp.ne.s32.totalorder %s74, %s88
      %p90 = scmp.eq.s32.totalorder %s22, 0
      %p91 = por %p89, %p90
      %s92 = ssub.s32 %s16, %s23
      %p93 = scmp.eq.s32.totalorder %s92, 0
      %s95 = sadd.s32 %s94, 1
      %s96 = scalar_select %p93, %s94, %s95
      %p99 = pneg %p93
      %p100 = scmp.eq.s32.totalorder %s16, 1
      %p101 = por %p99, %p100
      %p102 = scmp.ne.s32.totalorder %s94, %s97
      %p103 = scmp.eq.s32.totalorder %s16, 0
      %p104 = por %p102, %p103
      %p105 = scmp.ne.s32.totalorder %s94, %s97
      %p106 = scmp.eq.s32.totalorder %s21, 1
      %p107 = por %p105, %p106
      %p108 = scmp.ne.s32.totalorder %s97, %s98
      %p109 = scmp.eq.s32.totalorder %s21, 0
      %p110 = por %p108, %p109
      %p111 = scmp.ne.s32.totalorder %s97, %s98
      %p112 = scmp.eq.s32.totalorder %s22, 1
      %p113 = por %p111, %p112
      %p115 = scmp.ne.s32.totalorder %s98, %s114
      %p116 = scmp.eq.s32.totalorder %s22, 0
      %p117 = por %p115, %p116
      %p118 = scmp.le.s32.totalorder 1, %s16
      %p119 = scmp.lt.s32.totalorder %s16, 3
      %p120 = pnand %p118, %p119
      %p121 = pneg %p120
      // Predicated region
      $region9: #{tpu_custom_call.1} parent=5 // pred_check
        _
      $region10: #{tpu_custom_call.1} parent=5 // pred_check_branch
        %123 = sbr.rel (%p120) target = $region12
      $region11: #{tpu_custom_call.1} parent=5 // pred_region
        %s124 = ssub.s32 %s16, 1
        // Predicated region
        $region13: #{tpu_custom_call.1} parent=11 // pred_check
          %p125 = pneg %p63
        $region14: #{tpu_custom_call.1} parent=11 // pred_check_branch
          %127 = sbr.rel (%p125) target = $region16
        $region15: #{tpu_custom_call.1} parent=11 // pred_region
          %s129 = ssub.s32 30720, 30720
          %130 = vsyncadd [#allocation7], %s129
          %s131 = sshll.u32 [#allocation6], 4
          %s132 = int_to_ptr.vmem [resolvable:$true] %s131
          %137 = dma.hbm_to_vmem [thread:$0]  %s1, 30720, %s132, [#allocation7], 128, 128, 8
        $region16: #{tpu_custom_call.1} parent=11 // pred_fallthru
          _
        // Predicated region
        $region17: #{tpu_custom_call.1} parent=11 // pred_check
          %p138 = pneg %p84
        $region18: #{tpu_custom_call.1} parent=11 // pred_check_branch
          %140 = sbr.rel (%p138) target = $region20
        $region19: #{tpu_custom_call.1} parent=11 // pred_region
          _
        $region20: #{tpu_custom_call.1} parent=11 // pred_fallthru
          _
      $region12: #{tpu_custom_call.1} parent=5 // pred_fallthru
        _
      %p141 = scmp.lt.s32.totalorder %s16, 2
      // Predicated region
      $region21: #{tpu_custom_call.1} parent=5 // pred_check
        %p142 = pneg %p141
      $region22: #{tpu_custom_call.1} parent=5 // pred_check_branch
        %144 = sbr.rel (%p142) target = $region24
      $region23: #{tpu_custom_call.1} parent=5 // pred_region
        // Predicated region
        $region25: #{tpu_custom_call.1} parent=23 // pred_check
          %p145 = pneg %p36
        $region26: #{tpu_custom_call.1} parent=23 // pred_check_branch
          %147 = sbr.rel (%p145) target = $region28
        $region27: #{tpu_custom_call.1} parent=23 // pred_region
          %s148 = sand.u32 %s26, 1
          %s149 = scalar_lea.sflag [#allocation4], %s148
          %s150 = sand.u32 %s26, 1
          %s151 = smul.addr %s150, 16
          %s152 = scalar_lea.vmem [#allocation3], %s151
          %s154 = ssub.s32 256, 256
          %155 = vsyncadd %s149, %s154
          %s156 = smul.addr %s16, 2
          %s157 = smul.addr %s156, 128
          %s158 = scalar_lea.hbm %s0, %s157
          %s159 = sshll.u32 %s152, 4
          %s160 = int_to_ptr.vmem [resolvable:$true] %s159
          %165 = dma.hbm_to_vmem [thread:$0]  %s158, 256, %s160, %s149, 128, 128, 8
        $region28: #{tpu_custom_call.1} parent=23 // pred_fallthru
          _
      $region24: #{tpu_custom_call.1} parent=5 // pred_fallthru
        _
      %p166 = scmp.le.s32.totalorder 1, %s16
      %p167 = scmp.lt.s32.totalorder %s16, 3
      %p168 = pnand %p166, %p167
      %p169 = pneg %p168
      // Predicated region
      $region29: #{tpu_custom_call.1} parent=5 // pred_check
        _
      $region30: #{tpu_custom_call.1} parent=5 // pred_check_branch
        %171 = sbr.rel (%p168) target = $region32
      $region31: #{tpu_custom_call.1} parent=5 // pred_region
        %s172 = ssub.s32 %s16, 1
        %s173 = sand.u32 %s29, 1
        %s174 = scalar_lea.sflag [#allocation4], %s173
        %s175 = sand.u32 %s29, 1
        %s176 = smul.addr %s175, 16
        %s177 = scalar_lea.vmem [#allocation3], %s176
        // Predicated region
        $region33: #{tpu_custom_call.1} parent=31 // pred_check
          %p178 = pneg %p42
        $region34: #{tpu_custom_call.1} parent=31 // pred_check_branch
          %180 = sbr.rel (%p178) target = $region36
        $region35: #{tpu_custom_call.1} parent=31 // pred_region
          %181 = dma.done %s174, 256
        $region36: #{tpu_custom_call.1} parent=31 // pred_fallthru
          _
        // Predicated region
        $region37: #{tpu_custom_call.1} parent=31 // pred_check
          %p182 = pneg %p63
        $region38: #{tpu_custom_call.1} parent=31 // pred_check_branch
          %184 = sbr.rel (%p182) target = $region40
        $region39: #{tpu_custom_call.1} parent=31 // pred_region
          %185 = dma.done [#allocation7], 30720
        $region40: #{tpu_custom_call.1} parent=31 // pred_fallthru
          _
        %s186 = sand.u32 %s29, 1
        %s187 = scalar_lea.sflag [#allocation4], %s186
        %s188 = sand.u32 %s29, 1
        %s189 = smul.addr %s188, 16
        %s190 = scalar_lea.vmem [#allocation3], %s189
        %p191 = pneg %p42
        %p192 = pneg %p39
        %p193 = pneg %p63
        %p194 = pneg %p60
        %p195 = pneg %p84
        %p196 = pneg %p81
        %p197 = pneg %p110
        %p198 = pneg %p107
        %s199 = sand.u32 %s97, 1
        %s200 = scalar_lea.sflag [#allocation5], %s199
        %s201 = sand.u32 %s97, 1
        %s202 = smul.addr %s201, 16
        %s203 = scalar_lea.vmem [#allocation8], %s202
        %204 = vst [vmem:[#allocation2] sm:$0xff] 0.0
        %205 = vst [vmem:[#allocation2 + $0x8] sm:$0xff] 0.0
        %206 = vst [vmem:[#allocation2 + $0x10] sm:$0x3] 0.0
        %v207 = vld [vmem:[%s177] sm:$0xff]
        %v208 = vld [vmem:[%s177 + $0x8] sm:$0xff]
        %209 = vst [vmem:[#allocation2 + $0x1] sm:$0xff] %v207
        %210 = vst [vmem:[#allocation2 + $0x9] sm:$0xff] %v208
        %v211 = vld [vmem:[#allocation2] sm:$0xff]
        %v212 = vld [vmem:[#allocation2 + $0x8] sm:$0xff]
        %v213 = vld [vmem:[#allocation6] sm:$0xff]
        %v214 = vld [vmem:[#allocation6 + $0x8] sm:$0xff]
        %v215 = vld [vmem:[#allocation6 + $0x10] sm:$0xff]
        %v216 = vld [vmem:[#allocation6 + $0x18] sm:$0xff]
        %v217 = vld [vmem:[#allocation6 + $0x20] sm:$0xff]
        %v218 = vld [vmem:[#allocation6 + $0x28] sm:$0xff]
        %v219 = vld [vmem:[#allocation6 + $0x30] sm:$0xff]
        %v220 = vld [vmem:[#allocation6 + $0x38] sm:$0xff]
        %v221 = vld [vmem:[#allocation6 + $0x40] sm:$0xff]
        %v222 = vld [vmem:[#allocation6 + $0x48] sm:$0xff]
        %v223 = vld [vmem:[#allocation6 + $0x50] sm:$0xff]
        %v224 = vld [vmem:[#allocation6 + $0x58] sm:$0xff]
        %v225 = vld [vmem:[#allocation6 + $0x60] sm:$0xff]
        %v226 = vld [vmem:[#allocation6 + $0x68] sm:$0xff]
        %v227 = vld [vmem:[#allocation6 + $0x70] sm:$0xff]
        %v228 = vld [vmem:[#allocation6 + $0x78] sm:$0xff]
        %v229 = vld [vmem:[#allocation2 + $0x1] sm:$0xff]
        %v230 = vld [vmem:[#allocation2 + $0x9] sm:$0xff]
        %s231 = scalar_lea.vmem [#allocation6], 128
        %v232 = vld [vmem:[%s231] sm:$0xff]
        %v233 = vld [vmem:[%s231 + $0x8] sm:$0xff]
        %v234 = vld [vmem:[%s231 + $0x10] sm:$0xff]
        %v235 = vld [vmem:[%s231 + $0x18] sm:$0xff]
        %v236 = vld [vmem:[%s231 + $0x20] sm:$0xff]
        %v237 = vld [vmem:[%s231 + $0x28] sm:$0xff]
        %v238 = vld [vmem:[%s231 + $0x30] sm:$0xff]
        %v239 = vld [vmem:[%s231 + $0x38] sm:$0xff]
        %v240 = vld [vmem:[%s231 + $0x40] sm:$0xff]
        %v241 = vld [vmem:[%s231 + $0x48] sm:$0xff]
        %v242 = vld [vmem:[%s231 + $0x50] sm:$0xff]
        %v243 = vld [vmem:[%s231 + $0x58] sm:$0xff]
        %v244 = vld [vmem:[%s231 + $0x60] sm:$0xff]
        %v245 = vld [vmem:[%s231 + $0x68] sm:$0xff]
        %v246 = vld [vmem:[%s231 + $0x70] sm:$0xff]
        %v247 = vld [vmem:[%s231 + $0x78] sm:$0xff]
        %248 = vmatprep.subr.mxu0 0.0
        %249 = vmatpush1.msra.mxu0 %v232
        %250 = vmatprep.subr.mxu0 0.0
        %251 = vmatpush1.msra.mxu0 %v233
        %252 = vmatprep.subr.mxu0 0.0
        %253 = vmatpush1.msra.mxu0 %v234
        %254 = vmatprep.subr.mxu0 0.0
        %255 = vmatpush1.msra.mxu0 %v235
        %256 = vmatprep.subr.mxu0 0.0
        %257 = vmatpush1.msra.mxu0 %v236
        %258 = vmatprep.subr.mxu0 0.0
        %259 = vmatpush1.msra.mxu0 %v237
        %260 = vmatprep.subr.mxu0 0.0
        %261 = vmatpush1.msra.mxu0 %v238
        %262 = vmatprep.subr.mxu0 0.0
        %263 = vmatpush1.msra.mxu0 %v239
        %264 = vmatprep.subr.mxu0 0.0
        %265 = vmatpush1.msra.mxu0 %v240
        %266 = vmatprep.subr.mxu0 0.0
        %267 = vmatpush1.msra.mxu0 %v241
        %268 = vmatprep.subr.mxu0 0.0
        %269 = vmatpush1.msra.mxu0 %v242
        %270 = vmatprep.subr.mxu0 0.0
        %271 = vmatpush1.msra.mxu0 %v243
        %272 = vmatprep.subr.mxu0 0.0
        %273 = vmatpush1.msra.mxu0 %v244
        %274 = vmatprep.subr.mxu0 0.0
        %275 = vmatpush1.msra.mxu0 %v245
        %276 = vmatprep.subr.mxu0 0.0
        %277 = vmatpush1.msra.mxu0 %v246
        %278 = vmatprep.subr.mxu0 0.0
        %279 = vmatpush1.msra.mxu0 %v247
        %280 = vmatprep.subr.mxu0 0.0
        %281 = vmatpush1.msra.mxu0 0.0
        %282 = vmatprep.subr.mxu0 0.0
        %283 = vmatpush1.msra.mxu0 0.0
        %284 = vmatprep.subr.mxu0 0.0
        %285 = vmatpush1.msra.mxu0 0.0
        %286 = vmatprep.subr.mxu0 0.0
        %287 = vmatpush1.msra.mxu0 0.0
        %288 = vmatprep.subr.mxu0 0.0
        %289 = vmatpush1.msra.mxu0 0.0
        %290 = vmatprep.subr.mxu0 0.0
        %291 = vmatpush1.msra.mxu0 0.0
        %292 = vmatprep.subr.mxu0 0.0
        %293 = vmatpush1.msra.mxu0 0.0
        %294 = vmatprep.subr.mxu0 0.0
        %295 = vmatpush1.msra.mxu0 0.0
        %296 = vmatprep.subr.mxu0 0.0
        %297 = vmatpush1.msra.mxu0 0.0
        %298 = vmatprep.subr.mxu0 0.0
        %299 = vmatpush1.msra.mxu0 0.0
        %300 = vmatprep.subr.mxu0 0.0
        %301 = vmatpush1.msra.mxu0 0.0
        %302 = vmatprep.subr.mxu0 0.0
        %303 = vmatpush1.msra.mxu0 0.0
        %304 = vmatprep.subr.mxu0 0.0
        %305 = vmatpush1.msra.mxu0 0.0
        %306 = vmatprep.subr.mxu0 0.0
        %307 = vmatpush1.msra.mxu0 0.0
        %308 = vmatprep.subr.mxu0 0.0
        %309 = vmatpush1.msra.mxu0 0.0
        %310 = vmatprep.subr.mxu0 0.0
        %311 = vmatpush1.msra.mxu0 0.0
        %312 = vmatprep.mubr.f32.mxu0 0.0
        %313 = vmatmul.mubr.f32.gmra.mrb[0].mxu0 %v229
        %v314 = vpop.f32.mrb[0].mxu0
        %v315 = vadd.f32 0.0, %v314
        %v316 = vpop.f32.mrb[0].mxu0
        %317 = vmatprep.mubr.f32.mxu0 0.0
        %318 = vmatmul.mubr.f32.gmra.mrb[0].mxu0 %v230
        %v319 = vpop.f32.mrb[0].mxu0
        %v320 = vadd.f32 0.0, %v319
        %v321 = vpop.f32.mrb[0].mxu0
        %322 = vdwg.mxu0
        %323 = vmatprep.subr.mxu0 0.0
        %324 = vmatpush1.msra.mxu0 %v213
        %325 = vmatprep.subr.mxu0 0.0
        %326 = vmatpush1.msra.mxu0 %v214
        %327 = vmatprep.subr.mxu0 0.0
        %328 = vmatpush1.msra.mxu0 %v215
        %329 = vmatprep.subr.mxu0 0.0
        %330 = vmatpush1.msra.mxu0 %v216
        %331 = vmatprep.subr.mxu0 0.0
        %332 = vmatpush1.msra.mxu0 %v217
        %333 = vmatprep.subr.mxu0 0.0
        %334 = vmatpush1.msra.mxu0 %v218
        %335 = vmatprep.subr.mxu0 0.0
        %336 = vmatpush1.msra.mxu0 %v219
        %337 = vmatprep.subr.mxu0 0.0
        %338 = vmatpush1.msra.mxu0 %v220
        %339 = vmatprep.subr.mxu0 0.0
        %340 = vmatpush1.msra.mxu0 %v221
        %341 = vmatprep.subr.mxu0 0.0
        %342 = vmatpush1.msra.mxu0 %v222
        %343 = vmatprep.subr.mxu0 0.0
        %344 = vmatpush1.msra.mxu0 %v223
        %345 = vmatprep.subr.mxu0 0.0
        %346 = vmatpush1.msra.mxu0 %v224
        %347 = vmatprep.subr.mxu0 0.0
        %348 = vmatpush1.msra.mxu0 %v225
        %349 = vmatprep.subr.mxu0 0.0
        %350 = vmatpush1.msra.mxu0 %v226
        %351 = vmatprep.subr.mxu0 0.0
        %352 = vmatpush1.msra.mxu0 %v227
        %353 = vmatprep.subr.mxu0 0.0
        %354 = vmatpush1.msra.mxu0 %v228
        %355 = vmatprep.subr.mxu0 0.0
        %356 = vmatpush1.msra.mxu0 0.0
        %357 = vmatprep.subr.mxu0 0.0
        %358 = vmatpush1.msra.mxu0 0.0
        %359 = vmatprep.subr.mxu0 0.0
        %360 = vmatpush1.msra.mxu0 0.0
        %361 = vmatprep.subr.mxu0 0.0
        %362 = vmatpush1.msra.mxu0 0.0
        %363 = vmatprep.subr.mxu0 0.0
        %364 = vmatpush1.msra.mxu0 0.0
        %365 = vmatprep.subr.mxu0 0.0
        %366 = vmatpush1.msra.mxu0 0.0
        %367 = vmatprep.subr.mxu0 0.0
        %368 = vmatpush1.msra.mxu0 0.0
        %369 = vmatprep.subr.mxu0 0.0
        %370 = vmatpush1.msra.mxu0 0.0
        %371 = vmatprep.subr.mxu0 0.0
        %372 = vmatpush1.msra.mxu0 0.0
        %373 = vmatprep.subr.mxu0 0.0
        %374 = vmatpush1.msra.mxu0 0.0
        %375 = vmatprep.subr.mxu0 0.0
        %376 = vmatpush1.msra.mxu0 0.0
        %377 = vmatprep.subr.mxu0 0.0
        %378 = vmatpush1.msra.mxu0 0.0
        %379 = vmatprep.subr.mxu0 0.0
        %380 = vmatpush1.msra.mxu0 0.0
        %381 = vmatprep.subr.mxu0 0.0
        %382 = vmatpush1.msra.mxu0 0.0
        %383 = vmatprep.subr.mxu0 0.0
        %384 = vmatpush1.msra.mxu0 0.0
        %385 = vmatprep.subr.mxu0 0.0
        %386 = vmatpush1.msra.mxu0 0.0
        %387 = vmatprep.mubr.f32.mxu0 0.0
        %388 = vmatmul.mubr.f32.gmra.mrb[0].mxu0 %v211
        %v389 = vpop.f32.mrb[0].mxu0
        %v390 = vadd.f32 %v315, %v389
        %v391 = vpop.f32.mrb[0].mxu0
        %392 = vmatprep.mubr.f32.mxu0 0.0
        %393 = vmatmul.mubr.f32.gmra.mrb[0].mxu0 %v212
        %v394 = vpop.f32.mrb[0].mxu0
        %v395 = vadd.f32 %v320, %v394
        %v396 = vpop.f32.mrb[0].mxu0
        %397 = vdwg.mxu0
        %v398 = vld [vmem:[#allocation2 + $0x2] sm:$0xff]
        %v399 = vld [vmem:[#allocation2 + $0xa] sm:$0xff]
        %s400 = scalar_lea.vmem [#allocation6], 256
        %v401 = vld [vmem:[%s400] sm:$0xff]
        %v402 = vld [vmem:[%s400 + $0x8] sm:$0xff]
        %v403 = vld [vmem:[%s400 + $0x10] sm:$0xff]
        %v404 = vld [vmem:[%s400 + $0x18] sm:$0xff]
        %v405 = vld [vmem:[%s400 + $0x20] sm:$0xff]
        %v406 = vld [vmem:[%s400 + $0x28] sm:$0xff]
        %v407 = vld [vmem:[%s400 + $0x30] sm:$0xff]
        %v408 = vld [vmem:[%s400 + $0x38] sm:$0xff]
        %v409 = vld [vmem:[%s400 + $0x40] sm:$0xff]
        %v410 = vld [vmem:[%s400 + $0x48] sm:$0xff]
        %v411 = vld [vmem:[%s400 + $0x50] sm:$0xff]
        %v412 = vld [vmem:[%s400 + $0x58] sm:$0xff]
        %v413 = vld [vmem:[%s400 + $0x60] sm:$0xff]
        %v414 = vld [vmem:[%s400 + $0x68] sm:$0xff]
        %v415 = vld [vmem:[%s400 + $0x70] sm:$0xff]
        %v416 = vld [vmem:[%s400 + $0x78] sm:$0xff]
        %417 = vmatprep.subr.mxu0 0.0
        %418 = vmatpush1.msra.mxu0 %v401
        %419 = vmatprep.subr.mxu0 0.0
        %420 = vmatpush1.msra.mxu0 %v402
        %421 = vmatprep.subr.mxu0 0.0
        %422 = vmatpush1.msra.mxu0 %v403
        %423 = vmatprep.subr.mxu0 0.0
        %424 = vmatpush1.msra.mxu0 %v404
        %425 = vmatprep.subr.mxu0 0.0
        %426 = vmatpush1.msra.mxu0 %v405
        %427 = vmatprep.subr.mxu0 0.0
        %428 = vmatpush1.msra.mxu0 %v406
        %429 = vmatprep.subr.mxu0 0.0
        %430 = vmatpush1.msra.mxu0 %v407
        %431 = vmatprep.subr.mxu0 0.0
        %432 = vmatpush1.msra.mxu0 %v408
        %433 = vmatprep.subr.mxu0 0.0
        %434 = vmatpush1.msra.mxu0 %v409
        %435 = vmatprep.subr.mxu0 0.0
        %436 = vmatpush1.msra.mxu0 %v410
        %437 = vmatprep.subr.mxu0 0.0
        %438 = vmatpush1.msra.mxu0 %v411
        %439 = vmatprep.subr.mxu0 0.0
        %440 = vmatpush1.msra.mxu0 %v412
        %441 = vmatprep.subr.mxu0 0.0
        %442 = vmatpush1.msra.mxu0 %v413
        %443 = vmatprep.subr.mxu0 0.0
        %444 = vmatpush1.msra.mxu0 %v414
        %445 = vmatprep.subr.mxu0 0.0
        %446 = vmatpush1.msra.mxu0 %v415
        %447 = vmatprep.subr.mxu0 0.0
        %448 = vmatpush1.msra.mxu0 %v416
        %449 = vmatprep.subr.mxu0 0.0
        %450 = vmatpush1.msra.mxu0 0.0
        %451 = vmatprep.subr.mxu0 0.0
        %452 = vmatpush1.msra.mxu0 0.0
        %453 = vmatprep.subr.mxu0 0.0
        %454 = vmatpush1.msra.mxu0 0.0
        %455 = vmatprep.subr.mxu0 0.0
        %456 = vmatpush1.msra.mxu0 0.0
        %457 = vmatprep.subr.mxu0 0.0
        %458 = vmatpush1.msra.mxu0 0.0
        %459 = vmatprep.subr.mxu0 0.0
        %460 = vmatpush1.msra.mxu0 0.0
        %461 = vmatprep.subr.mxu0 0.0
        %462 = vmatpush1.msra.mxu0 0.0
        %463 = vmatprep.subr.mxu0 0.0
        %464 = vmatpush1.msra.mxu0 0.0
        %465 = vmatprep.subr.mxu0 0.0
        %466 = vmatpush1.msra.mxu0 0.0
        %467 = vmatprep.subr.mxu0 0.0
        %468 = vmatpush1.msra.mxu0 0.0
        %469 = vmatprep.subr.mxu0 0.0
        %470 = vmatpush1.msra.mxu0 0.0
        %471 = vmatprep.subr.mxu0 0.0
        %472 = vmatpush1.msra.mxu0 0.0
        %473 = vmatprep.subr.mxu0 0.0
        %474 = vmatpush1.msra.mxu0 0.0
        %475 = vmatprep.subr.mxu0 0.0
        %476 = vmatpush1.msra.mxu0 0.0
        %477 = vmatprep.subr.mxu0 0.0
        %478 = vmatpush1.msra.mxu0 0.0
        %479 = vmatprep.subr.mxu0 0.0
        %480 = vmatpush1.msra.mxu0 0.0
        %481 = vmatprep.mubr.f32.mxu0 0.0
        %482 = vmatmul.mubr.f32.gmra.mrb[0].mxu0 %v398
        %v483 = vpop.f32.mrb[0].mxu0
        %v484 = vadd.f32 0.0, %v483
        %v485 = vpop.f32.mrb[0].mxu0
        %486 = vmatprep.mubr.f32.mxu0 0.0
        %487 = vmatmul.mubr.f32.gmra.mrb[0].mxu0 %v399
        %v488 = vpop.f32.mrb[0].mxu0
        %v489 = vadd.f32 0.0, %v488
        %v490 = vpop.f32.mrb[0].mxu0
        %491 = vdwg.mxu0
        %v492 = vadd.f32 %v390, %v484
        %v493 = vadd.f32 %v395, %v489
        %v494 = vld [vmem:[%s2] sm:$0x1]
        %v496 = vlaneseq
        %v497 = vshrl.u32 %v496, 7
        %v498 = vsub.s32 0, %v497
        %v499 = vrot.slane %v494, %v498
        %v501 = vadd.f32 %v492, %v499
        %v502 = vadd.f32 %v493, %v499
        %v503 = vmax.f32 %v501, 0.0
        %v504 = vmax.f32 %v502, 0.0
        %505 = vst [vmem:[#allocation2 + $0x1] sm:$0xff] %v503
        %506 = vst [vmem:[#allocation2 + $0x9] sm:$0xff] %v504
        %v507 = vld [vmem:[#allocation2] sm:$0xff]
        %v508 = vld [vmem:[#allocation2 + $0x8] sm:$0xff]
        %s509 = scalar_lea.vmem [#allocation6], 384
        %v510 = vld [vmem:[%s509] sm:$0xff]
        %v511 = vld [vmem:[%s509 + $0x8] sm:$0xff]
        %v512 = vld [vmem:[%s509 + $0x10] sm:$0xff]
        %v513 = vld [vmem:[%s509 + $0x18] sm:$0xff]
        %v514 = vld [vmem:[%s509 + $0x20] sm:$0xff]
        %v515 = vld [vmem:[%s509 + $0x28] sm:$0xff]
        %v516 = vld [vmem:[%s509 + $0x30] sm:$0xff]
        %v517 = vld [vmem:[%s509 + $0x38] sm:$0xff]
        %v518 = vld [vmem:[%s509 + $0x40] sm:$0xff]
        %v519 = vld [vmem:[%s509 + $0x48] sm:$0xff]
        %v520 = vld [vmem:[%s509 + $0x50] sm:$0xff]
        %v521 = vld [vmem:[%s509 + $0x58] sm:$0xff]
        %v522 = vld [vmem:[%s509 + $0x60] sm:$0xff]
        %v523 = vld [vmem:[%s509 + $0x68] sm:$0xff]
        %v524 = vld [vmem:[%s509 + $0x70] sm:$0xff]
        %v525 = vld [vmem:[%s509 + $0x78] sm:$0xff]
        %v526 = vld [vmem:[#allocation2 + $0x1] sm:$0xff]
        %v527 = vld [vmem:[#allocation2 + $0x9] sm:$0xff]
        %s528 = scalar_lea.vmem [#allocation6], 512
        %v529 = vld [vmem:[%s528] sm:$0xff]
        %v530 = vld [vmem:[%s528 + $0x8] sm:$0xff]
        %v531 = vld [vmem:[%s528 + $0x10] sm:$0xff]
        %v532 = vld [vmem:[%s528 + $0x18] sm:$0xff]
        %v533 = vld [vmem:[%s528 + $0x20] sm:$0xff]
        %v534 = vld [vmem:[%s528 + $0x28] sm:$0xff]
        %v535 = vld [vmem:[%s528 + $0x30] sm:$0xff]
        %v536 = vld [vmem:[%s528 + $0x38] sm:$0xff]
        %v537 = vld [vmem:[%s528 + $0x40] sm:$0xff]
        %v538 = vld [vmem:[%s528 + $0x48] sm:$0xff]
        %v539 = vld [vmem:[%s528 + $0x50] sm:$0xff]
        %v540 = vld [vmem:[%s528 + $0x58] sm:$0xff]
        %v541 = vld [vmem:[%s528 + $0x60] sm:$0xff]
        %v542 = vld [vmem:[%s528 + $0x68] sm:$0xff]
        %v543 = vld [vmem:[%s528 + $0x70] sm:$0xff]
        %v544 = vld [vmem:[%s528 + $0x78] sm:$0xff]
        %545 = vmatprep.subr.mxu0 0.0
        %546 = vmatpush1.msra.mxu0 %v529
        %547 = vmatprep.subr.mxu0 0.0
        %548 = vmatpush1.msra.mxu0 %v530
        %549 = vmatprep.subr.mxu0 0.0
        %550 = vmatpush1.msra.mxu0 %v531
        %551 = vmatprep.subr.mxu0 0.0
        %552 = vmatpush1.msra.mxu0 %v532
        %553 = vmatprep.subr.mxu0 0.0
        %554 = vmatpush1.msra.mxu0 %v533
        %555 = vmatprep.subr.mxu0 0.0
        %556 = vmatpush1.msra.mxu0 %v534
        %557 = vmatprep.subr.mxu0 0.0
        %558 = vmatpush1.msra.mxu0 %v535
        %559 = vmatprep.subr.mxu0 0.0
        %560 = vmatpush1.msra.mxu0 %v536
        %561 = vmatprep.subr.mxu0 0.0
        %562 = vmatpush1.msra.mxu0 %v537
        %563 = vmatprep.subr.mxu0 0.0
        %564 = vmatpush1.msra.mxu0 %v538
        %565 = vmatprep.subr.mxu0 0.0
        %566 = vmatpush1.msra.mxu0 %v539
        %567 = vmatprep.subr.mxu0 0.0
        %568 = vmatpush1.msra.mxu0 %v540
        %569 = vmatprep.subr.mxu0 0.0
        %570 = vmatpush1.msra.mxu0 %v541
        %571 = vmatprep.subr.mxu0 0.0
        %572 = vmatpush1.msra.mxu0 %v542
        %573 = vmatprep.subr.mxu0 0.0
        %574 = vmatpush1.msra.mxu0 %v543
        %575 = vmatprep.subr.mxu0 0.0
        %576 = vmatpush1.msra.mxu0 %v544
        %577 = vmatprep.subr.mxu0 0.0
        %578 = vmatpush1.msra.mxu0 0.0
        %579 = vmatprep.subr.mxu0 0.0
        %580 = vmatpush1.msra.mxu0 0.0
        %581 = vmatprep.subr.mxu0 0.0
        %582 = vmatpush1.msra.mxu0 0.0
        %583 = vmatprep.subr.mxu0 0.0
        %584 = vmatpush1.msra.mxu0 0.0
        %585 = vmatprep.subr.mxu0 0.0
        %586 = vmatpush1.msra.mxu0 0.0
        %587 = vmatprep.subr.mxu0 0.0
        %588 = vmatpush1.msra.mxu0 0.0
        %589 = vmatprep.subr.mxu0 0.0
        %590 = vmatpush1.msra.mxu0 0.0
        %591 = vmatprep.subr.mxu0 0.0
        %592 = vmatpush1.msra.mxu0 0.0
        %593 = vmatprep.subr.mxu0 0.0
        %594 = vmatpush1.msra.mxu0 0.0
        %595 = vmatprep.subr.mxu0 0.0
        %596 = vmatpush1.msra.mxu0 0.0
        %597 = vmatprep.subr.mxu0 0.0
        %598 = vmatpush1.msra.mxu0 0.0
        %599 = vmatprep.subr.mxu0 0.0
        %600 = vmatpush1.msra.mxu0 0.0
        %601 = vmatprep.subr.mxu0 0.0
        %602 = vmatpush1.msra.mxu0 0.0
        %603 = vmatprep.subr.mxu0 0.0
        %604 = vmatpush1.msra.mxu0 0.0
        %605 = vmatprep.subr.mxu0 0.0
        %606 = vmatpush1.msra.mxu0 0.0
        %607 = vmatprep.subr.mxu0 0.0
        %608 = vmatpush1.msra.mxu0 0.0
        %609 = vmatprep.mubr.f32.mxu0 0.0
        %610 = vmatmul.mubr.f32.gmra.mrb[0].mxu0 %v526
        %v611 = vpop.f32.mrb[0].mxu0
        %v612 = vadd.f32 0.0, %v611
        %v613 = vpop.f32.mrb[0].mxu0
        %614 = vmatprep.mubr.f32.mxu0 0.0
        %615 = vmatmul.mubr.f32.gmra.mrb[0].mxu0 %v527
        %v616 = vpop.f32.mrb[0].mxu0
        %v617 = vadd.f32 0.0, %v616
        %v618 = vpop.f32.mrb[0].mxu0
        %619 = vdwg.mxu0
        %620 = vmatprep.subr.mxu0 0.0
        %621 = vmatpush1.msra.mxu0 %v510
        %622 = vmatprep.subr.mxu0 0.0
        %623 = vmatpush1.msra.mxu0 %v511
        %624 = vmatprep.subr.mxu0 0.0
        %625 = vmatpush1.msra.mxu0 %v512
        %626 = vmatprep.subr.mxu0 0.0
        %627 = vmatpush1.msra.mxu0 %v513
        %628 = vmatprep.subr.mxu0 0.0
        %629 = vmatpush1.msra.mxu0 %v514
        %630 = vmatprep.subr.mxu0 0.0
        %631 = vmatpush1.msra.mxu0 %v515
        %632 = vmatprep.subr.mxu0 0.0
        %633 = vmatpush1.msra.mxu0 %v516
        %634 = vmatprep.subr.mxu0 0.0
        %635 = vmatpush1.msra.mxu0 %v517
        %636 = vmatprep.subr.mxu0 0.0
        %637 = vmatpush1.msra.mxu0 %v518
        %638 = vmatprep.subr.mxu0 0.0
        %639 = vmatpush1.msra.mxu0 %v519
        %640 = vmatprep.subr.mxu0 0.0
        %641 = vmatpush1.msra.mxu0 %v520
        %642 = vmatprep.subr.mxu0 0.0
        %643 = vmatpush1.msra.mxu0 %v521
        %644 = vmatprep.subr.mxu0 0.0
        %645 = vmatpush1.msra.mxu0 %v522
        %646 = vmatprep.subr.mxu0 0.0
        %647 = vmatpush1.msra.mxu0 %v523
        %648 = vmatprep.subr.mxu0 0.0
        %649 = vmatpush1.msra.mxu0 %v524
        %650 = vmatprep.subr.mxu0 0.0
        %651 = vmatpush1.msra.mxu0 %v525
        %652 = vmatprep.subr.mxu0 0.0
        %653 = vmatpush1.msra.mxu0 0.0
        %654 = vmatprep.subr.mxu0 0.0
        %655 = vmatpush1.msra.mxu0 0.0
        %656 = vmatprep.subr.mxu0 0.0
        %657 = vmatpush1.msra.mxu0 0.0
        %658 = vmatprep.subr.mxu0 0.0
        %659 = vmatpush1.msra.mxu0 0.0
        %660 = vmatprep.subr.mxu0 0.0
        %661 = vmatpush1.msra.mxu0 0.0
        %662 = vmatprep.subr.mxu0 0.0
        %663 = vmatpush1.msra.mxu0 0.0
        %664 = vmatprep.subr.mxu0 0.0
        %665 = vmatpush1.msra.mxu0 0.0
        %666 = vmatprep.subr.mxu0 0.0
        %667 = vmatpush1.msra.mxu0 0.0
        %668 = vmatprep.subr.mxu0 0.0
        %669 = vmatpush1.msra.mxu0 0.0
        %670 = vmatprep.subr.mxu0 0.0
        %671 = vmatpush1.msra.mxu0 0.0
        %672 = vmatprep.subr.mxu0 0.0
        %673 = vmatpush1.msra.mxu0 0.0
        %674 = vmatprep.subr.mxu0 0.0
        %675 = vmatpush1.msra.mxu0 0.0
        %676 = vmatprep.subr.mxu0 0.0
        %677 = vmatpush1.msra.mxu0 0.0
        %678 = vmatprep.subr.mxu0 0.0
        %679 = vmatpush1.msra.mxu0 0.0
        %680 = vmatprep.subr.mxu0 0.0
        %681 = vmatpush1.msra.mxu0 0.0
        %682 = vmatprep.subr.mxu0 0.0
        %683 = vmatpush1.msra.mxu0 0.0
        %684 = vmatprep.mubr.f32.mxu0 0.0
        %685 = vmatmul.mubr.f32.gmra.mrb[0].mxu0 %v507
        %v686 = vpop.f32.mrb[0].mxu0
        %v687 = vadd.f32 %v612, %v686
        %v688 = vpop.f32.mrb[0].mxu0
        %689 = vmatprep.mubr.f32.mxu0 0.0
        %690 = vmatmul.mubr.f32.gmra.mrb[0].mxu0 %v508
        %v691 = vpop.f32.mrb[0].mxu0
        %v692 = vadd.f32 %v617, %v691
        %v693 = vpop.f32.mrb[0].mxu0
        %694 = vdwg.mxu0
        %v695 = vld [vmem:[#allocation2 + $0x2] sm:$0xff]
        %v696 = vld [vmem:[#allocation2 + $0xa] sm:$0xff]
        %s697 = scalar_lea.vmem [#allocation6], 640
        %v698 = vld [vmem:[%s697] sm:$0xff]
        %v699 = vld [vmem:[%s697 + $0x8] sm:$0xff]
        %v700 = vld [vmem:[%s697 + $0x10] sm:$0xff]
        %v701 = vld [vmem:[%s697 + $0x18] sm:$0xff]
        %v702 = vld [vmem:[%s697 + $0x20] sm:$0xff]
        %v703 = vld [vmem:[%s697 + $0x28] sm:$0xff]
        %v704 = vld [vmem:[%s697 + $0x30] sm:$0xff]
        %v705 = vld [vmem:[%s697 + $0x38] sm:$0xff]
        %v706 = vld [vmem:[%s697 + $0x40] sm:$0xff]
        %v707 = vld [vmem:[%s697 + $0x48] sm:$0xff]
        %v708 = vld [vmem:[%s697 + $0x50] sm:$0xff]
        %v709 = vld [vmem:[%s697 + $0x58] sm:$0xff]
        %v710 = vld [vmem:[%s697 + $0x60] sm:$0xff]
        %v711 = vld [vmem:[%s697 + $0x68] sm:$0xff]
        %v712 = vld [vmem:[%s697 + $0x70] sm:$0xff]
        %v713 = vld [vmem:[%s697 + $0x78] sm:$0xff]
        %714 = vmatprep.subr.mxu0 0.0
        %715 = vmatpush1.msra.mxu0 %v698
        %716 = vmatprep.subr.mxu0 0.0
        %717 = vmatpush1.msra.mxu0 %v699
        %718 = vmatprep.subr.mxu0 0.0
        %719 = vmatpush1.msra.mxu0 %v700
        %720 = vmatprep.subr.mxu0 0.0
        %721 = vmatpush1.msra.mxu0 %v701
        %722 = vmatprep.subr.mxu0 0.0
        %723 = vmatpush1.msra.mxu0 %v702
        %724 = vmatprep.subr.mxu0 0.0
        %725 = vmatpush1.msra.mxu0 %v703
        %726 = vmatprep.subr.mxu0 0.0
        %727 = vmatpush1.msra.mxu0 %v704
        %728 = vmatprep.subr.mxu0 0.0
        %729 = vmatpush1.msra.mxu0 %v705
        %730 = vmatprep.subr.mxu0 0.0
        %731 = vmatpush1.msra.mxu0 %v706
        %732 = vmatprep.subr.mxu0 0.0
        %733 = vmatpush1.msra.mxu0 %v707
        %734 = vmatprep.subr.mxu0 0.0
        %735 = vmatpush1.msra.mxu0 %v708
        %736 = vmatprep.subr.mxu0 0.0
        %737 = vmatpush1.msra.mxu0 %v709
        %738 = vmatprep.subr.mxu0 0.0
        %739 = vmatpush1.msra.mxu0 %v710
        %740 = vmatprep.subr.mxu0 0.0
        %741 = vmatpush1.msra.mxu0 %v711
        %742 = vmatprep.subr.mxu0 0.0
        %743 = vmatpush1.msra.mxu0 %v712
        %744 = vmatprep.subr.mxu0 0.0
        %745 = vmatpush1.msra.mxu0 %v713
        %746 = vmatprep.subr.mxu0 0.0
        %747 = vmatpush1.msra.mxu0 0.0
        %748 = vmatprep.subr.mxu0 0.0
        %749 = vmatpush1.msra.mxu0 0.0
        %750 = vmatprep.subr.mxu0 0.0
        %751 = vmatpush1.msra.mxu0 0.0
        %752 = vmatprep.subr.mxu0 0.0
        %753 = vmatpush1.msra.mxu0 0.0
        %754 = vmatprep.subr.mxu0 0.0
        %755 = vmatpush1.msra.mxu0 0.0
        %756 = vmatprep.subr.mxu0 0.0
        %757 = vmatpush1.msra.mxu0 0.0
        %758 = vmatprep.subr.mxu0 0.0
        %759 = vmatpush1.msra.mxu0 0.0
        %760 = vmatprep.subr.mxu0 0.0
        %761 = vmatpush1.msra.mxu0 0.0
        %762 = vmatprep.subr.mxu0 0.0
        %763 = vmatpush1.msra.mxu0 0.0
        %764 = vmatprep.subr.mxu0 0.0
        %765 = vmatpush1.msra.mxu0 0.0
        %766 = vmatprep.subr.mxu0 0.0
        %767 = vmatpush1.msra.mxu0 0.0
        %768 = vmatprep.subr.mxu0 0.0
        %769 = vmatpush1.msra.mxu0 0.0
        %770 = vmatprep.subr.mxu0 0.0
        %771 = vmatpush1.msra.mxu0 0.0
        %772 = vmatprep.subr.mxu0 0.0
        %773 = vmatpush1.msra.mxu0 0.0
        %774 = vmatprep.subr.mxu0 0.0
        %775 = vmatpush1.msra.mxu0 0.0
        %776 = vmatprep.subr.mxu0 0.0
        %777 = vmatpush1.msra.mxu0 0.0
        %778 = vmatprep.mubr.f32.mxu0 0.0
        %779 = vmatmul.mubr.f32.gmra.mrb[0].mxu0 %v695
        %v780 = vpop.f32.mrb[0].mxu0
        %v781 = vadd.f32 0.0, %v780
        %v782 = vpop.f32.mrb[0].mxu0
        %783 = vmatprep.mubr.f32.mxu0 0.0
        %784 = vmatmul.mubr.f32.gmra.mrb[0].mxu0 %v696
        %v785 = vpop.f32.mrb[0].mxu0
        %v786 = vadd.f32 0.0, %v785
        %v787 = vpop.f32.mrb[0].mxu0
        %788 = vdwg.mxu0
        %v789 = vadd.f32 %v687, %v781
        %v790 = vadd.f32 %v692, %v786
        %s791 = scalar_lea.vmem %s2, 1
        %v792 = vld [vmem:[%s791] sm:$0x1]
        %v794 = vlaneseq
        %v795 = vshrl.u32 %v794, 7
        %v796 = vsub.s32 0, %v795
        %v797 = vrot.slane %v792, %v796
        %v799 = vadd.f32 %v789, %v797
        %v800 = vadd.f32 %v790, %v797
        %v801 = vmul.f32 %v799, 0.1
        %v802 = vmul.f32 %v800, 0.1
        %v803 = vadd.f32 %v207, %v801
        %v804 = vadd.f32 %v208, %v802
        %805 = vst [vmem:[#allocation2 + $0x1] sm:$0xff] %v803
        %806 = vst [vmem:[#allocation2 + $0x9] sm:$0xff] %v804
        %v807 = vld [vmem:[#allocation2] sm:$0xff]
        %v808 = vld [vmem:[#allocation2 + $0x8] sm:$0xff]
        %s809 = scalar_lea.vmem [#allocation6], 768
        %v810 = vld [vmem:[%s809] sm:$0xff]
        %v811 = vld [vmem:[%s809 + $0x8] sm:$0xff]
        %v812 = vld [vmem:[%s809 + $0x10] sm:$0xff]
        %v813 = vld [vmem:[%s809 + $0x18] sm:$0xff]
        %v814 = vld [vmem:[%s809 + $0x20] sm:$0xff]
        %v815 = vld [vmem:[%s809 + $0x28] sm:$0xff]
        %v816 = vld [vmem:[%s809 + $0x30] sm:$0xff]
        %v817 = vld [vmem:[%s809 + $0x38] sm:$0xff]
        %v818 = vld [vmem:[%s809 + $0x40] sm:$0xff]
        %v819 = vld [vmem:[%s809 + $0x48] sm:$0xff]
        %v820 = vld [vmem:[%s809 + $0x50] sm:$0xff]
        %v821 = vld [vmem:[%s809 + $0x58] sm:$0xff]
        %v822 = vld [vmem:[%s809 + $0x60] sm:$0xff]
        %v823 = vld [vmem:[%s809 + $0x68] sm:$0xff]
        %v824 = vld [vmem:[%s809 + $0x70] sm:$0xff]
        %v825 = vld [vmem:[%s809 + $0x78] sm:$0xff]
        %v826 = vld [vmem:[#allocation2 + $0x1] sm:$0xff]
        %v827 = vld [vmem:[#allocation2 + $0x9] sm:$0xff]
        %s828 = scalar_lea.vmem [#allocation6], 896
        %v829 = vld [vmem:[%s828] sm:$0xff]
        %v830 = vld [vmem:[%s828 + $0x8] sm:$0xff]
        %v831 = vld [vmem:[%s828 + $0x10] sm:$0xff]
        %v832 = vld [vmem:[%s828 + $0x18] sm:$0xff]
        %v833 = vld [vmem:[%s828 + $0x20] sm:$0xff]
        %v834 = vld [vmem:[%s828 + $0x28] sm:$0xff]
        %v835 = vld [vmem:[%s828 + $0x30] sm:$0xff]
        %v836 = vld [vmem:[%s828 + $0x38] sm:$0xff]
        %v837 = vld [vmem:[%s828 + $0x40] sm:$0xff]
        %v838 = vld [vmem:[%s828 + $0x48] sm:$0xff]
        %v839 = vld [vmem:[%s828 + $0x50] sm:$0xff]
        %v840 = vld [vmem:[%s828 + $0x58] sm:$0xff]
        %v841 = vld [vmem:[%s828 + $0x60] sm:$0xff]
        %v842 = vld [vmem:[%s828 + $0x68] sm:$0xff]
        %v843 = vld [vmem:[%s828 + $0x70] sm:$0xff]
        %v844 = vld [vmem:[%s828 + $0x78] sm:$0xff]
        %845 = vmatprep.subr.mxu0 0.0
        %846 = vmatpush1.msra.mxu0 %v829
        %847 = vmatprep.subr.mxu0 0.0
        %848 = vmatpush1.msra.mxu0 %v830
        %849 = vmatprep.subr.mxu0 0.0
        %850 = vmatpush1.msra.mxu0 %v831
        %851 = vmatprep.subr.mxu0 0.0
        %852 = vmatpush1.msra.mxu0 %v832
        %853 = vmatprep.subr.mxu0 0.0
        %854 = vmatpush1.msra.mxu0 %v833
        %855 = vmatprep.subr.mxu0 0.0
        %856 = vmatpush1.msra.mxu0 %v834
        %857 = vmatprep.subr.mxu0 0.0
        %858 = vmatpush1.msra.mxu0 %v835
        %859 = vmatprep.subr.mxu0 0.0
        %860 = vmatpush1.msra.mxu0 %v836
        %861 = vmatprep.subr.mxu0 0.0
        %862 = vmatpush1.msra.mxu0 %v837
        %863 = vmatprep.subr.mxu0 0.0
        %864 = vmatpush1.msra.mxu0 %v838
        %865 = vmatprep.subr.mxu0 0.0
        %866 = vmatpush1.msra.mxu0 %v839
        %867 = vmatprep.subr.mxu0 0.0
        %868 = vmatpush1.msra.mxu0 %v840
        %869 = vmatprep.subr.mxu0 0.0
        %870 = vmatpush1.msra.mxu0 %v841
        %871 = vmatprep.subr.mxu0 0.0
        %872 = vmatpush1.msra.mxu0 %v842
        %873 = vmatprep.subr.mxu0 0.0
        %874 = vmatpush1.msra.mxu0 %v843
        %875 = vmatprep.subr.mxu0 0.0
        %876 = vmatpush1.msra.mxu0 %v844
        %877 = vmatprep.subr.mxu0 0.0
        %878 = vmatpush1.msra.mxu0 0.0
        %879 = vmatprep.subr.mxu0 0.0
        %880 = vmatpush1.msra.mxu0 0.0
        %881 = vmatprep.subr.mxu0 0.0
        %882 = vmatpush1.msra.mxu0 0.0
        %883 = vmatprep.subr.mxu0 0.0
        %884 = vmatpush1.msra.mxu0 0.0
        %885 = vmatprep.subr.mxu0 0.0
        %886 = vmatpush1.msra.mxu0 0.0
        %887 = vmatprep.subr.mxu0 0.0
        %888 = vmatpush1.msra.mxu0 0.0
        %889 = vmatprep.subr.mxu0 0.0
        %890 = vmatpush1.msra.mxu0 0.0
        %891 = vmatprep.subr.mxu0 0.0
        %892 = vmatpush1.msra.mxu0 0.0
        %893 = vmatprep.subr.mxu0 0.0
        %894 = vmatpush1.msra.mxu0 0.0
        %895 = vmatprep.subr.mxu0 0.0
        %896 = vmatpush1.msra.mxu0 0.0
        %897 = vmatprep.subr.mxu0 0.0
        %898 = vmatpush1.msra.mxu0 0.0
        %899 = vmatprep.subr.mxu0 0.0
        %900 = vmatpush1.msra.mxu0 0.0
        %901 = vmatprep.subr.mxu0 0.0
        %902 = vmatpush1.msra.mxu0 0.0
        %903 = vmatprep.subr.mxu0 0.0
        %904 = vmatpush1.msra.mxu0 0.0
        %905 = vmatprep.subr.mxu0 0.0
        %906 = vmatpush1.msra.mxu0 0.0
        %907 = vmatprep.subr.mxu0 0.0
        %908 = vmatpush1.msra.mxu0 0.0
        %909 = vmatprep.mubr.f32.mxu0 0.0
        %910 = vmatmul.mubr.f32.gmra.mrb[0].mxu0 %v826
        %v911 = vpop.f32.mrb[0].mxu0
        %v912 = vadd.f32 0.0, %v911
        %v913 = vpop.f32.mrb[0].mxu0
        %914 = vmatprep.mubr.f32.mxu0 0.0
        %915 = vmatmul.mubr.f32.gmra.mrb[0].mxu0 %v827
        %v916 = vpop.f32.mrb[0].mxu0
        %v917 = vadd.f32 0.0, %v916
        %v918 = vpop.f32.mrb[0].mxu0
        %919 = vdwg.mxu0
        %920 = vmatprep.subr.mxu0 0.0
        %921 = vmatpush1.msra.mxu0 %v810
        %922 = vmatprep.subr.mxu0 0.0
        %923 = vmatpush1.msra.mxu0 %v811
        %924 = vmatprep.subr.mxu0 0.0
        %925 = vmatpush1.msra.mxu0 %v812
        %926 = vmatprep.subr.mxu0 0.0
        %927 = vmatpush1.msra.mxu0 %v813
        %928 = vmatprep.subr.mxu0 0.0
        %929 = vmatpush1.msra.mxu0 %v814
        %930 = vmatprep.subr.mxu0 0.0
        %931 = vmatpush1.msra.mxu0 %v815
        %932 = vmatprep.subr.mxu0 0.0
        %933 = vmatpush1.msra.mxu0 %v816
        %934 = vmatprep.subr.mxu0 0.0
        %935 = vmatpush1.msra.mxu0 %v817
        %936 = vmatprep.subr.mxu0 0.0
        %937 = vmatpush1.msra.mxu0 %v818
        %938 = vmatprep.subr.mxu0 0.0
        %939 = vmatpush1.msra.mxu0 %v819
        %940 = vmatprep.subr.mxu0 0.0
        %941 = vmatpush1.msra.mxu0 %v820
        %942 = vmatprep.subr.mxu0 0.0
        %943 = vmatpush1.msra.mxu0 %v821
        %944 = vmatprep.subr.mxu0 0.0
        %945 = vmatpush1.msra.mxu0 %v822
        %946 = vmatprep.subr.mxu0 0.0
        %947 = vmatpush1.msra.mxu0 %v823
        %948 = vmatprep.subr.mxu0 0.0
        %949 = vmatpush1.msra.mxu0 %v824
        %950 = vmatprep.subr.mxu0 0.0
        %951 = vmatpush1.msra.mxu0 %v825
        %952 = vmatprep.subr.mxu0 0.0
        %953 = vmatpush1.msra.mxu0 0.0
        %954 = vmatprep.subr.mxu0 0.0
        %955 = vmatpush1.msra.mxu0 0.0
        %956 = vmatprep.subr.mxu0 0.0
        %957 = vmatpush1.msra.mxu0 0.0
        %958 = vmatprep.subr.mxu0 0.0
        %959 = vmatpush1.msra.mxu0 0.0
        %960 = vmatprep.subr.mxu0 0.0
        %961 = vmatpush1.msra.mxu0 0.0
        %962 = vmatprep.subr.mxu0 0.0
        %963 = vmatpush1.msra.mxu0 0.0
        %964 = vmatprep.subr.mxu0 0.0
        %965 = vmatpush1.msra.mxu0 0.0
        %966 = vmatprep.subr.mxu0 0.0
        %967 = vmatpush1.msra.mxu0 0.0
        %968 = vmatprep.subr.mxu0 0.0
        %969 = vmatpush1.msra.mxu0 0.0
        %970 = vmatprep.subr.mxu0 0.0
        %971 = vmatpush1.msra.mxu0 0.0
        %972 = vmatprep.subr.mxu0 0.0
        %973 = vmatpush1.msra.mxu0 0.0
        %974 = vmatprep.subr.mxu0 0.0
        %975 = vmatpush1.msra.mxu0 0.0
        %976 = vmatprep.subr.mxu0 0.0
        %977 = vmatpush1.msra.mxu0 0.0
        %978 = vmatprep.subr.mxu0 0.0
        %979 = vmatpush1.msra.mxu0 0.0
        %980 = vmatprep.subr.mxu0 0.0
        %981 = vmatpush1.msra.mxu0 0.0
        %982 = vmatprep.subr.mxu0 0.0
        %983 = vmatpush1.msra.mxu0 0.0
        %984 = vmatprep.mubr.f32.mxu0 0.0
        %985 = vmatmul.mubr.f32.gmra.mrb[0].mxu0 %v807
        %v986 = vpop.f32.mrb[0].mxu0
        %v987 = vadd.f32 %v912, %v986
        %v988 = vpop.f32.mrb[0].mxu0
        %989 = vmatprep.mubr.f32.mxu0 0.0
        %990 = vmatmul.mubr.f32.gmra.mrb[0].mxu0 %v808
        %v991 = vpop.f32.mrb[0].mxu0
        %v992 = vadd.f32 %v917, %v991
        %v993 = vpop.f32.mrb[0].mxu0
        %994 = vdwg.mxu0
        %v995 = vld [vmem:[#allocation2 + $0x2] sm:$0xff]
        %v996 = vld [vmem:[#allocation2 + $0xa] sm:$0xff]
        %s997 = scalar_lea.vmem [#allocation6], 1024
        %v998 = vld [vmem:[%s997] sm:$0xff]
        %v999 = vld [vmem:[%s997 + $0x8] sm:$0xff]
        %v1000 = vld [vmem:[%s997 + $0x10] sm:$0xff]
        %v1001 = vld [vmem:[%s997 + $0x18] sm:$0xff]
        %v1002 = vld [vmem:[%s997 + $0x20] sm:$0xff]
        %v1003 = vld [vmem:[%s997 + $0x28] sm:$0xff]
        %v1004 = vld [vmem:[%s997 + $0x30] sm:$0xff]
        %v1005 = vld [vmem:[%s997 + $0x38] sm:$0xff]
        %v1006 = vld [vmem:[%s997 + $0x40] sm:$0xff]
        %v1007 = vld [vmem:[%s997 + $0x48] sm:$0xff]
        %v1008 = vld [vmem:[%s997 + $0x50] sm:$0xff]
        %v1009 = vld [vmem:[%s997 + $0x58] sm:$0xff]
        %v1010 = vld [vmem:[%s997 + $0x60] sm:$0xff]
        %v1011 = vld [vmem:[%s997 + $0x68] sm:$0xff]
        %v1012 = vld [vmem:[%s997 + $0x70] sm:$0xff]
        %v1013 = vld [vmem:[%s997 + $0x78] sm:$0xff]
        %1014 = vmatprep.subr.mxu0 0.0
        %1015 = vmatpush1.msra.mxu0 %v998
        %1016 = vmatprep.subr.mxu0 0.0
        %1017 = vmatpush1.msra.mxu0 %v999
        %1018 = vmatprep.subr.mxu0 0.0
        %1019 = vmatpush1.msra.mxu0 %v1000
        %1020 = vmatprep.subr.mxu0 0.0
        %1021 = vmatpush1.msra.mxu0 %v1001
        %1022 = vmatprep.subr.mxu0 0.0
        %1023 = vmatpush1.msra.mxu0 %v1002
        %1024 = vmatprep.subr.mxu0 0.0
        %1025 = vmatpush1.msra.mxu0 %v1003
        %1026 = vmatprep.subr.mxu0 0.0
        %1027 = vmatpush1.msra.mxu0 %v1004
        %1028 = vmatprep.subr.mxu0 0.0
        %1029 = vmatpush1.msra.mxu0 %v1005
        %1030 = vmatprep.subr.mxu0 0.0
        %1031 = vmatpush1.msra.mxu0 %v1006
        %1032 = vmatprep.subr.mxu0 0.0
        %1033 = vmatpush1.msra.mxu0 %v1007
        %1034 = vmatprep.subr.mxu0 0.0
        %1035 = vmatpush1.msra.mxu0 %v1008
        %1036 = vmatprep.subr.mxu0 0.0
        %1037 = vmatpush1.msra.mxu0 %v1009
        %1038 = vmatprep.subr.mxu0 0.0
        %1039 = vmatpush1.msra.mxu0 %v1010
        %1040 = vmatprep.subr.mxu0 0.0
        %1041 = vmatpush1.msra.mxu0 %v1011
        %1042 = vmatprep.subr.mxu0 0.0
        %1043 = vmatpush1.msra.mxu0 %v1012
        %1044 = vmatprep.subr.mxu0 0.0
        %1045 = vmatpush1.msra.mxu0 %v1013
        %1046 = vmatprep.subr.mxu0 0.0
        %1047 = vmatpush1.msra.mxu0 0.0
        %1048 = vmatprep.subr.mxu0 0.0
        %1049 = vmatpush1.msra.mxu0 0.0
        %1050 = vmatprep.subr.mxu0 0.0
        %1051 = vmatpush1.msra.mxu0 0.0
        %1052 = vmatprep.subr.mxu0 0.0
        %1053 = vmatpush1.msra.mxu0 0.0
        %1054 = vmatprep.subr.mxu0 0.0
        %1055 = vmatpush1.msra.mxu0 0.0
        %1056 = vmatprep.subr.mxu0 0.0
        %1057 = vmatpush1.msra.mxu0 0.0
        %1058 = vmatprep.subr.mxu0 0.0
        %1059 = vmatpush1.msra.mxu0 0.0
        %1060 = vmatprep.subr.mxu0 0.0
        %1061 = vmatpush1.msra.mxu0 0.0
        %1062 = vmatprep.subr.mxu0 0.0
        %1063 = vmatpush1.msra.mxu0 0.0
        %1064 = vmatprep.subr.mxu0 0.0
        %1065 = vmatpush1.msra.mxu0 0.0
        %1066 = vmatprep.subr.mxu0 0.0
        %1067 = vmatpush1.msra.mxu0 0.0
        %1068 = vmatprep.subr.mxu0 0.0
        %1069 = vmatpush1.msra.mxu0 0.0
        %1070 = vmatprep.subr.mxu0 0.0
        %1071 = vmatpush1.msra.mxu0 0.0
        %1072 = vmatprep.subr.mxu0 0.0
        %1073 = vmatpush1.msra.mxu0 0.0
        %1074 = vmatprep.subr.mxu0 0.0
        %1075 = vmatpush1.msra.mxu0 0.0
        %1076 = vmatprep.subr.mxu0 0.0
        %1077 = vmatpush1.msra.mxu0 0.0
        %1078 = vmatprep.mubr.f32.mxu0 0.0
        %1079 = vmatmul.mubr.f32.gmra.mrb[0].mxu0 %v995
        %v1080 = vpop.f32.mrb[0].mxu0
        %v1081 = vadd.f32 0.0, %v1080
        %v1082 = vpop.f32.mrb[0].mxu0
        %1083 = vmatprep.mubr.f32.mxu0 0.0
        %1084 = vmatmul.mubr.f32.gmra.mrb[0].mxu0 %v996
        %v1085 = vpop.f32.mrb[0].mxu0
        %v1086 = vadd.f32 0.0, %v1085
        %v1087 = vpop.f32.mrb[0].mxu0
        %1088 = vdwg.mxu0
        %v1089 = vadd.f32 %v987, %v1081
        %v1090 = vadd.f32 %v992, %v1086
        %s1091 = scalar_lea.vmem %s2, 2
        %v1092 = vld [vmem:[%s1091] sm:$0x1]
        %v1094 = vlaneseq
        %v1095 = vshrl.u32 %v1094, 7
        %v1096 = vsub.s32 0, %v1095
        %v1097 = vrot.slane %v1092, %v1096
        %v1099 = vadd.f32 %v1089, %v1097
        %v1100 = vadd.f32 %v1090, %v1097
        %v1101 = vmax.f32 %v1099, 0.0
        %v1102 = vmax.f32 %v1100, 0.0
        %1103 = vst [vmem:[#allocation2 + $0x1] sm:$0xff] %v1101
        %1104 = vst [vmem:[#allocation2 + $0x9] sm:$0xff] %v1102
        %v1105 = vld [vmem:[#allocation2] sm:$0xff]
        %v1106 = vld [vmem:[#allocation2 + $0x8] sm:$0xff]
        %s1107 = scalar_lea.vmem [#allocation6], 1152
        %v1108 = vld [vmem:[%s1107] sm:$0xff]
        %v1109 = vld [vmem:[%s1107 + $0x8] sm:$0xff]
        %v1110 = vld [vmem:[%s1107 + $0x10] sm:$0xff]
        %v1111 = vld [vmem:[%s1107 + $0x18] sm:$0xff]
        %v1112 = vld [vmem:[%s1107 + $0x20] sm:$0xff]
        %v1113 = vld [vmem:[%s1107 + $0x28] sm:$0xff]
        %v1114 = vld [vmem:[%s1107 + $0x30] sm:$0xff]
        %v1115 = vld [vmem:[%s1107 + $0x38] sm:$0xff]
        %v1116 = vld [vmem:[%s1107 + $0x40] sm:$0xff]
        %v1117 = vld [vmem:[%s1107 + $0x48] sm:$0xff]
        %v1118 = vld [vmem:[%s1107 + $0x50] sm:$0xff]
        %v1119 = vld [vmem:[%s1107 + $0x58] sm:$0xff]
        %v1120 = vld [vmem:[%s1107 + $0x60] sm:$0xff]
        %v1121 = vld [vmem:[%s1107 + $0x68] sm:$0xff]
        %v1122 = vld [vmem:[%s1107 + $0x70] sm:$0xff]
        %v1123 = vld [vmem:[%s1107 + $0x78] sm:$0xff]
        %v1124 = vld [vmem:[#allocation2 + $0x1] sm:$0xff]
        %v1125 = vld [vmem:[#allocation2 + $0x9] sm:$0xff]
        %s1126 = scalar_lea.vmem [#allocation6], 1280
        %v1127 = vld [vmem:[%s1126] sm:$0xff]
        %v1128 = vld [vmem:[%s1126 + $0x8] sm:$0xff]
        %v1129 = vld [vmem:[%s1126 + $0x10] sm:$0xff]
        %v1130 = vld [vmem:[%s1126 + $0x18] sm:$0xff]
        %v1131 = vld [vmem:[%s1126 + $0x20] sm:$0xff]
        %v1132 = vld [vmem:[%s1126 + $0x28] sm:$0xff]
        %v1133 = vld [vmem:[%s1126 + $0x30] sm:$0xff]
        %v1134 = vld [vmem:[%s1126 + $0x38] sm:$0xff]
        %v1135 = vld [vmem:[%s1126 + $0x40] sm:$0xff]
        %v1136 = vld [vmem:[%s1126 + $0x48] sm:$0xff]
        %v1137 = vld [vmem:[%s1126 + $0x50] sm:$0xff]
        %v1138 = vld [vmem:[%s1126 + $0x58] sm:$0xff]
        %v1139 = vld [vmem:[%s1126 + $0x60] sm:$0xff]
        %v1140 = vld [vmem:[%s1126 + $0x68] sm:$0xff]
        %v1141 = vld [vmem:[%s1126 + $0x70] sm:$0xff]
        %v1142 = vld [vmem:[%s1126 + $0x78] sm:$0xff]
        %1143 = vmatprep.subr.mxu0 0.0
        %1144 = vmatpush1.msra.mxu0 %v1127
        %1145 = vmatprep.subr.mxu0 0.0
        %1146 = vmatpush1.msra.mxu0 %v1128
        %1147 = vmatprep.subr.mxu0 0.0
        %1148 = vmatpush1.msra.mxu0 %v1129
        %1149 = vmatprep.subr.mxu0 0.0
        %1150 = vmatpush1.msra.mxu0 %v1130
        %1151 = vmatprep.subr.mxu0 0.0
        %1152 = vmatpush1.msra.mxu0 %v1131
        %1153 = vmatprep.subr.mxu0 0.0
        %1154 = vmatpush1.msra.mxu0 %v1132
        %1155 = vmatprep.subr.mxu0 0.0
        %1156 = vmatpush1.msra.mxu0 %v1133
        %1157 = vmatprep.subr.mxu0 0.0
        %1158 = vmatpush1.msra.mxu0 %v1134
        %1159 = vmatprep.subr.mxu0 0.0
        %1160 = vmatpush1.msra.mxu0 %v1135
        %1161 = vmatprep.subr.mxu0 0.0
        %1162 = vmatpush1.msra.mxu0 %v1136
        %1163 = vmatprep.subr.mxu0 0.0
        %1164 = vmatpush1.msra.mxu0 %v1137
        %1165 = vmatprep.subr.mxu0 0.0
        %1166 = vmatpush1.msra.mxu0 %v1138
        %1167 = vmatprep.subr.mxu0 0.0
        %1168 = vmatpush1.msra.mxu0 %v1139
        %1169 = vmatprep.subr.mxu0 0.0
        %1170 = vmatpush1.msra.mxu0 %v1140
        %1171 = vmatprep.subr.mxu0 0.0
        %1172 = vmatpush1.msra.mxu0 %v1141
        %1173 = vmatprep.subr.mxu0 0.0
        %1174 = vmatpush1.msra.mxu0 %v1142
        %1175 = vmatprep.subr.mxu0 0.0
        %1176 = vmatpush1.msra.mxu0 0.0
        %1177 = vmatprep.subr.mxu0 0.0
        %1178 = vmatpush1.msra.mxu0 0.0
        %1179 = vmatprep.subr.mxu0 0.0
        %1180 = vmatpush1.msra.mxu0 0.0
        %1181 = vmatprep.subr.mxu0 0.0
        %1182 = vmatpush1.msra.mxu0 0.0
        %1183 = vmatprep.subr.mxu0 0.0
        %1184 = vmatpush1.msra.mxu0 0.0
        %1185 = vmatprep.subr.mxu0 0.0
        %1186 = vmatpush1.msra.mxu0 0.0
        %1187 = vmatprep.subr.mxu0 0.0
        %1188 = vmatpush1.msra.mxu0 0.0
        %1189 = vmatprep.subr.mxu0 0.0
        %1190 = vmatpush1.msra.mxu0 0.0
        %1191 = vmatprep.subr.mxu0 0.0
        %1192 = vmatpush1.msra.mxu0 0.0
        %1193 = vmatprep.subr.mxu0 0.0
        %1194 = vmatpush1.msra.mxu0 0.0
        %1195 = vmatprep.subr.mxu0 0.0
        %1196 = vmatpush1.msra.mxu0 0.0
        %1197 = vmatprep.subr.mxu0 0.0
        %1198 = vmatpush1.msra.mxu0 0.0
        %1199 = vmatprep.subr.mxu0 0.0
        %1200 = vmatpush1.msra.mxu0 0.0
        %1201 = vmatprep.subr.mxu0 0.0
        %1202 = vmatpush1.msra.mxu0 0.0
        %1203 = vmatprep.subr.mxu0 0.0
        %1204 = vmatpush1.msra.mxu0 0.0
        %1205 = vmatprep.subr.mxu0 0.0
        %1206 = vmatpush1.msra.mxu0 0.0
        %1207 = vmatprep.mubr.f32.mxu0 0.0
        %1208 = vmatmul.mubr.f32.gmra.mrb[0].mxu0 %v1124
        %v1209 = vpop.f32.mrb[0].mxu0
        %v1210 = vadd.f32 0.0, %v1209
        %v1211 = vpop.f32.mrb[0].mxu0
        %1212 = vmatprep.mubr.f32.mxu0 0.0
        %1213 = vmatmul.mubr.f32.gmra.mrb[0].mxu0 %v1125
        %v1214 = vpop.f32.mrb[0].mxu0
        %v1215 = vadd.f32 0.0, %v1214
        %v1216 = vpop.f32.mrb[0].mxu0
        %1217 = vdwg.mxu0
        %1218 = vmatprep.subr.mxu0 0.0
        %1219 = vmatpush1.msra.mxu0 %v1108
        %1220 = vmatprep.subr.mxu0 0.0
        %1221 = vmatpush1.msra.mxu0 %v1109
        %1222 = vmatprep.subr.mxu0 0.0
        %1223 = vmatpush1.msra.mxu0 %v1110
        %1224 = vmatprep.subr.mxu0 0.0
        %1225 = vmatpush1.msra.mxu0 %v1111
        %1226 = vmatprep.subr.mxu0 0.0
        %1227 = vmatpush1.msra.mxu0 %v1112
        %1228 = vmatprep.subr.mxu0 0.0
        %1229 = vmatpush1.msra.mxu0 %v1113
        %1230 = vmatprep.subr.mxu0 0.0
        %1231 = vmatpush1.msra.mxu0 %v1114
        %1232 = vmatprep.subr.mxu0 0.0
        %1233 = vmatpush1.msra.mxu0 %v1115
        %1234 = vmatprep.subr.mxu0 0.0
        %1235 = vmatpush1.msra.mxu0 %v1116
        %1236 = vmatprep.subr.mxu0 0.0
        %1237 = vmatpush1.msra.mxu0 %v1117
        %1238 = vmatprep.subr.mxu0 0.0
        %1239 = vmatpush1.msra.mxu0 %v1118
        %1240 = vmatprep.subr.mxu0 0.0
        %1241 = vmatpush1.msra.mxu0 %v1119
        %1242 = vmatprep.subr.mxu0 0.0
        %1243 = vmatpush1.msra.mxu0 %v1120
        %1244 = vmatprep.subr.mxu0 0.0
        %1245 = vmatpush1.msra.mxu0 %v1121
        %1246 = vmatprep.subr.mxu0 0.0
        %1247 = vmatpush1.msra.mxu0 %v1122
        %1248 = vmatprep.subr.mxu0 0.0
        %1249 = vmatpush1.msra.mxu0 %v1123
        %1250 = vmatprep.subr.mxu0 0.0
        %1251 = vmatpush1.msra.mxu0 0.0
        %1252 = vmatprep.subr.mxu0 0.0
        %1253 = vmatpush1.msra.mxu0 0.0
        %1254 = vmatprep.subr.mxu0 0.0
        %1255 = vmatpush1.msra.mxu0 0.0
        %1256 = vmatprep.subr.mxu0 0.0
        %1257 = vmatpush1.msra.mxu0 0.0
        %1258 = vmatprep.subr.mxu0 0.0
        %1259 = vmatpush1.msra.mxu0 0.0
        %1260 = vmatprep.subr.mxu0 0.0
        %1261 = vmatpush1.msra.mxu0 0.0
        %1262 = vmatprep.subr.mxu0 0.0
        %1263 = vmatpush1.msra.mxu0 0.0
        %1264 = vmatprep.subr.mxu0 0.0
        %1265 = vmatpush1.msra.mxu0 0.0
        %1266 = vmatprep.subr.mxu0 0.0
        %1267 = vmatpush1.msra.mxu0 0.0
        %1268 = vmatprep.subr.mxu0 0.0
        %1269 = vmatpush1.msra.mxu0 0.0
        %1270 = vmatprep.subr.mxu0 0.0
        %1271 = vmatpush1.msra.mxu0 0.0
        %1272 = vmatprep.subr.mxu0 0.0
        %1273 = vmatpush1.msra.mxu0 0.0
        %1274 = vmatprep.subr.mxu0 0.0
        %1275 = vmatpush1.msra.mxu0 0.0
        %1276 = vmatprep.subr.mxu0 0.0
        %1277 = vmatpush1.msra.mxu0 0.0
        %1278 = vmatprep.subr.mxu0 0.0
        %1279 = vmatpush1.msra.mxu0 0.0
        %1280 = vmatprep.subr.mxu0 0.0
        %1281 = vmatpush1.msra.mxu0 0.0
        %1282 = vmatprep.mubr.f32.mxu0 0.0
        %1283 = vmatmul.mubr.f32.gmra.mrb[0].mxu0 %v1105
        %v1284 = vpop.f32.mrb[0].mxu0
        %v1285 = vadd.f32 %v1210, %v1284
        %v1286 = vpop.f32.mrb[0].mxu0
        %1287 = vmatprep.mubr.f32.mxu0 0.0
        %1288 = vmatmul.mubr.f32.gmra.mrb[0].mxu0 %v1106
        %v1289 = vpop.f32.mrb[0].mxu0
        %v1290 = vadd.f32 %v1215, %v1289
        %v1291 = vpop.f32.mrb[0].mxu0
        %1292 = vdwg.mxu0
        %v1293 = vld [vmem:[#allocation2 + $0x2] sm:$0xff]
        %v1294 = vld [vmem:[#allocation2 + $0xa] sm:$0xff]
        %s1295 = scalar_lea.vmem [#allocation6], 1408
        %v1296 = vld [vmem:[%s1295] sm:$0xff]
        %v1297 = vld [vmem:[%s1295 + $0x8] sm:$0xff]
        %v1298 = vld [vmem:[%s1295 + $0x10] sm:$0xff]
        %v1299 = vld [vmem:[%s1295 + $0x18] sm:$0xff]
        %v1300 = vld [vmem:[%s1295 + $0x20] sm:$0xff]
        %v1301 = vld [vmem:[%s1295 + $0x28] sm:$0xff]
        %v1302 = vld [vmem:[%s1295 + $0x30] sm:$0xff]
        %v1303 = vld [vmem:[%s1295 + $0x38] sm:$0xff]
        %v1304 = vld [vmem:[%s1295 + $0x40] sm:$0xff]
        %v1305 = vld [vmem:[%s1295 + $0x48] sm:$0xff]
        %v1306 = vld [vmem:[%s1295 + $0x50] sm:$0xff]
        %v1307 = vld [vmem:[%s1295 + $0x58] sm:$0xff]
        %v1308 = vld [vmem:[%s1295 + $0x60] sm:$0xff]
        %v1309 = vld [vmem:[%s1295 + $0x68] sm:$0xff]
        %v1310 = vld [vmem:[%s1295 + $0x70] sm:$0xff]
        %v1311 = vld [vmem:[%s1295 + $0x78] sm:$0xff]
        %1312 = vmatprep.subr.mxu0 0.0
        %1313 = vmatpush1.msra.mxu0 %v1296
        %1314 = vmatprep.subr.mxu0 0.0
        %1315 = vmatpush1.msra.mxu0 %v1297
        %1316 = vmatprep.subr.mxu0 0.0
        %1317 = vmatpush1.msra.mxu0 %v1298
        %1318 = vmatprep.subr.mxu0 0.0
        %1319 = vmatpush1.msra.mxu0 %v1299
        %1320 = vmatprep.subr.mxu0 0.0
        %1321 = vmatpush1.msra.mxu0 %v1300
        %1322 = vmatprep.subr.mxu0 0.0
        %1323 = vmatpush1.msra.mxu0 %v1301
        %1324 = vmatprep.subr.mxu0 0.0
        %1325 = vmatpush1.msra.mxu0 %v1302
        %1326 = vmatprep.subr.mxu0 0.0
        %1327 = vmatpush1.msra.mxu0 %v1303
        %1328 = vmatprep.subr.mxu0 0.0
        %1329 = vmatpush1.msra.mxu0 %v1304
        %1330 = vmatprep.subr.mxu0 0.0
        %1331 = vmatpush1.msra.mxu0 %v1305
        %1332 = vmatprep.subr.mxu0 0.0
        %1333 = vmatpush1.msra.mxu0 %v1306
        %1334 = vmatprep.subr.mxu0 0.0
        %1335 = vmatpush1.msra.mxu0 %v1307
        %1336 = vmatprep.subr.mxu0 0.0
        %1337 = vmatpush1.msra.mxu0 %v1308
        %1338 = vmatprep.subr.mxu0 0.0
        %1339 = vmatpush1.msra.mxu0 %v1309
        %1340 = vmatprep.subr.mxu0 0.0
        %1341 = vmatpush1.msra.mxu0 %v1310
        %1342 = vmatprep.subr.mxu0 0.0
        %1343 = vmatpush1.msra.mxu0 %v1311
        %1344 = vmatprep.subr.mxu0 0.0
        %1345 = vmatpush1.msra.mxu0 0.0
        %1346 = vmatprep.subr.mxu0 0.0
        %1347 = vmatpush1.msra.mxu0 0.0
        %1348 = vmatprep.subr.mxu0 0.0
        %1349 = vmatpush1.msra.mxu0 0.0
        %1350 = vmatprep.subr.mxu0 0.0
        %1351 = vmatpush1.msra.mxu0 0.0
        %1352 = vmatprep.subr.mxu0 0.0
        %1353 = vmatpush1.msra.mxu0 0.0
        %1354 = vmatprep.subr.mxu0 0.0
        %1355 = vmatpush1.msra.mxu0 0.0
        %1356 = vmatprep.subr.mxu0 0.0
        %1357 = vmatpush1.msra.mxu0 0.0
        %1358 = vmatprep.subr.mxu0 0.0
        %1359 = vmatpush1.msra.mxu0 0.0
        %1360 = vmatprep.subr.mxu0 0.0
        %1361 = vmatpush1.msra.mxu0 0.0
        %1362 = vmatprep.subr.mxu0 0.0
        %1363 = vmatpush1.msra.mxu0 0.0
        %1364 = vmatprep.subr.mxu0 0.0
        %1365 = vmatpush1.msra.mxu0 0.0
        %1366 = vmatprep.subr.mxu0 0.0
        %1367 = vmatpush1.msra.mxu0 0.0
        %1368 = vmatprep.subr.mxu0 0.0
        %1369 = vmatpush1.msra.mxu0 0.0
        %1370 = vmatprep.subr.mxu0 0.0
        %1371 = vmatpush1.msra.mxu0 0.0
        %1372 = vmatprep.subr.mxu0 0.0
        %1373 = vmatpush1.msra.mxu0 0.0
        %1374 = vmatprep.subr.mxu0 0.0
        %1375 = vmatpush1.msra.mxu0 0.0
        %1376 = vmatprep.mubr.f32.mxu0 0.0
        %1377 = vmatmul.mubr.f32.gmra.mrb[0].mxu0 %v1293
        %v1378 = vpop.f32.mrb[0].mxu0
        %v1379 = vadd.f32 0.0, %v1378
        %v1380 = vpop.f32.mrb[0].mxu0
        %1381 = vmatprep.mubr.f32.mxu0 0.0
        %1382 = vmatmul.mubr.f32.gmra.mrb[0].mxu0 %v1294
        %v1383 = vpop.f32.mrb[0].mxu0
        %v1384 = vadd.f32 0.0, %v1383
        %v1385 = vpop.f32.mrb[0].mxu0
        %1386 = vdwg.mxu0
        %v1387 = vadd.f32 %v1285, %v1379
        %v1388 = vadd.f32 %v1290, %v1384
        %s1389 = scalar_lea.vmem %s2, 3
        %v1390 = vld [vmem:[%s1389] sm:$0x1]
        %v1392 = vlaneseq
        %v1393 = vshrl.u32 %v1392, 7
        %v1394 = vsub.s32 0, %v1393
        %v1395 = vrot.slane %v1390, %v1394
        %v1397 = vadd.f32 %v1387, %v1395
        %v1398 = vadd.f32 %v1388, %v1395
        %v1399 = vmul.f32 %v1397, 0.1
        %v1400 = vmul.f32 %v1398, 0.1
        %v1401 = vadd.f32 %v803, %v1399
        %v1402 = vadd.f32 %v804, %v1400
        %1403 = vst [vmem:[#allocation2 + $0x1] sm:$0xff] %v1401
        %1404 = vst [vmem:[#allocation2 + $0x9] sm:$0xff] %v1402
        %v1405 = vld [vmem:[#allocation2] sm:$0xff]
        %v1406 = vld [vmem:[#allocation2 + $0x8] sm:$0xff]
        %s1407 = scalar_lea.vmem [#allocation6], 1536
        %v1408 = vld [vmem:[%s1407] sm:$0xff]
        %v1409 = vld [vmem:[%s1407 + $0x8] sm:$0xff]
        %v1410 = vld [vmem:[%s1407 + $0x10] sm:$0xff]
        %v1411 = vld [vmem:[%s1407 + $0x18] sm:$0xff]
        %v1412 = vld [vmem:[%s1407 + $0x20] sm:$0xff]
        %v1413 = vld [vmem:[%s1407 + $0x28] sm:$0xff]
        %v1414 = vld [vmem:[%s1407 + $0x30] sm:$0xff]
        %v1415 = vld [vmem:[%s1407 + $0x38] sm:$0xff]
        %v1416 = vld [vmem:[%s1407 + $0x40] sm:$0xff]
        %v1417 = vld [vmem:[%s1407 + $0x48] sm:$0xff]
        %v1418 = vld [vmem:[%s1407 + $0x50] sm:$0xff]
        %v1419 = vld [vmem:[%s1407 + $0x58] sm:$0xff]
        %v1420 = vld [vmem:[%s1407 + $0x60] sm:$0xff]
        %v1421 = vld [vmem:[%s1407 + $0x68] sm:$0xff]
        %v1422 = vld [vmem:[%s1407 + $0x70] sm:$0xff]
        %v1423 = vld [vmem:[%s1407 + $0x78] sm:$0xff]
        %v1424 = vld [vmem:[#allocation2 + $0x1] sm:$0xff]
        %v1425 = vld [vmem:[#allocation2 + $0x9] sm:$0xff]
        %s1426 = scalar_lea.vmem [#allocation6], 1664
        %v1427 = vld [vmem:[%s1426] sm:$0xff]
        %v1428 = vld [vmem:[%s1426 + $0x8] sm:$0xff]
        %v1429 = vld [vmem:[%s1426 + $0x10] sm:$0xff]
        %v1430 = vld [vmem:[%s1426 + $0x18] sm:$0xff]
        %v1431 = vld [vmem:[%s1426 + $0x20] sm:$0xff]
        %v1432 = vld [vmem:[%s1426 + $0x28] sm:$0xff]
        %v1433 = vld [vmem:[%s1426 + $0x30] sm:$0xff]
        %v1434 = vld [vmem:[%s1426 + $0x38] sm:$0xff]
        %v1435 = vld [vmem:[%s1426 + $0x40] sm:$0xff]
        %v1436 = vld [vmem:[%s1426 + $0x48] sm:$0xff]
        %v1437 = vld [vmem:[%s1426 + $0x50] sm:$0xff]
        %v1438 = vld [vmem:[%s1426 + $0x58] sm:$0xff]
        %v1439 = vld [vmem:[%s1426 + $0x60] sm:$0xff]
        %v1440 = vld [vmem:[%s1426 + $0x68] sm:$0xff]
        %v1441 = vld [vmem:[%s1426 + $0x70] sm:$0xff]
        %v1442 = vld [vmem:[%s1426 + $0x78] sm:$0xff]
        %1443 = vmatprep.subr.mxu0 0.0
        %1444 = vmatpush1.msra.mxu0 %v1427
        %1445 = vmatprep.subr.mxu0 0.0
        %1446 = vmatpush1.msra.mxu0 %v1428
        %1447 = vmatprep.subr.mxu0 0.0
        %1448 = vmatpush1.msra.mxu0 %v1429
        %1449 = vmatprep.subr.mxu0 0.0
        %1450 = vmatpush1.msra.mxu0 %v1430
        %1451 = vmatprep.subr.mxu0 0.0
        %1452 = vmatpush1.msra.mxu0 %v1431
        %1453 = vmatprep.subr.mxu0 0.0
        %1454 = vmatpush1.msra.mxu0 %v1432
        %1455 = vmatprep.subr.mxu0 0.0
        %1456 = vmatpush1.msra.mxu0 %v1433
        %1457 = vmatprep.subr.mxu0 0.0
        %1458 = vmatpush1.msra.mxu0 %v1434
        %1459 = vmatprep.subr.mxu0 0.0
        %1460 = vmatpush1.msra.mxu0 %v1435
        %1461 = vmatprep.subr.mxu0 0.0
        %1462 = vmatpush1.msra.mxu0 %v1436
        %1463 = vmatprep.subr.mxu0 0.0
        %1464 = vmatpush1.msra.mxu0 %v1437
        %1465 = vmatprep.subr.mxu0 0.0
        %1466 = vmatpush1.msra.mxu0 %v1438
        %1467 = vmatprep.subr.mxu0 0.0
        %1468 = vmatpush1.msra.mxu0 %v1439
        %1469 = vmatprep.subr.mxu0 0.0
        %1470 = vmatpush1.msra.mxu0 %v1440
        %1471 = vmatprep.subr.mxu0 0.0
        %1472 = vmatpush1.msra.mxu0 %v1441
        %1473 = vmatprep.subr.mxu0 0.0
        %1474 = vmatpush1.msra.mxu0 %v1442
        %1475 = vmatprep.subr.mxu0 0.0
        %1476 = vmatpush1.msra.mxu0 0.0
        %1477 = vmatprep.subr.mxu0 0.0
        %1478 = vmatpush1.msra.mxu0 0.0
        %1479 = vmatprep.subr.mxu0 0.0
        %1480 = vmatpush1.msra.mxu0 0.0
        %1481 = vmatprep.subr.mxu0 0.0
        %1482 = vmatpush1.msra.mxu0 0.0
        %1483 = vmatprep.subr.mxu0 0.0
        %1484 = vmatpush1.msra.mxu0 0.0
        %1485 = vmatprep.subr.mxu0 0.0
        %1486 = vmatpush1.msra.mxu0 0.0
        %1487 = vmatprep.subr.mxu0 0.0
        %1488 = vmatpush1.msra.mxu0 0.0
        %1489 = vmatprep.subr.mxu0 0.0
        %1490 = vmatpush1.msra.mxu0 0.0
        %1491 = vmatprep.subr.mxu0 0.0
        %1492 = vmatpush1.msra.mxu0 0.0
        %1493 = vmatprep.subr.mxu0 0.0
        %1494 = vmatpush1.msra.mxu0 0.0
        %1495 = vmatprep.subr.mxu0 0.0
        %1496 = vmatpush1.msra.mxu0 0.0
        %1497 = vmatprep.subr.mxu0 0.0
        %1498 = vmatpush1.msra.mxu0 0.0
        %1499 = vmatprep.subr.mxu0 0.0
        %1500 = vmatpush1.msra.mxu0 0.0
        %1501 = vmatprep.subr.mxu0 0.0
        %1502 = vmatpush1.msra.mxu0 0.0
        %1503 = vmatprep.subr.mxu0 0.0
        %1504 = vmatpush1.msra.mxu0 0.0
        %1505 = vmatprep.subr.mxu0 0.0
        %1506 = vmatpush1.msra.mxu0 0.0
        %1507 = vmatprep.mubr.f32.mxu0 0.0
        %1508 = vmatmul.mubr.f32.gmra.mrb[0].mxu0 %v1424
        %v1509 = vpop.f32.mrb[0].mxu0
        %v1510 = vadd.f32 0.0, %v1509
        %v1511 = vpop.f32.mrb[0].mxu0
        %1512 = vmatprep.mubr.f32.mxu0 0.0
        %1513 = vmatmul.mubr.f32.gmra.mrb[0].mxu0 %v1425
        %v1514 = vpop.f32.mrb[0].mxu0
        %v1515 = vadd.f32 0.0, %v1514
        %v1516 = vpop.f32.mrb[0].mxu0
        %1517 = vdwg.mxu0
        %1518 = vmatprep.subr.mxu0 0.0
        %1519 = vmatpush1.msra.mxu0 %v1408
        %1520 = vmatprep.subr.mxu0 0.0
        %1521 = vmatpush1.msra.mxu0 %v1409
        %1522 = vmatprep.subr.mxu0 0.0
        %1523 = vmatpush1.msra.mxu0 %v1410
        %1524 = vmatprep.subr.mxu0 0.0
        %1525 = vmatpush1.msra.mxu0 %v1411
        %1526 = vmatprep.subr.mxu0 0.0
        %1527 = vmatpush1.msra.mxu0 %v1412
        %1528 = vmatprep.subr.mxu0 0.0
        %1529 = vmatpush1.msra.mxu0 %v1413
        %1530 = vmatprep.subr.mxu0 0.0
        %1531 = vmatpush1.msra.mxu0 %v1414
        %1532 = vmatprep.subr.mxu0 0.0
        %1533 = vmatpush1.msra.mxu0 %v1415
        %1534 = vmatprep.subr.mxu0 0.0
        %1535 = vmatpush1.msra.mxu0 %v1416
        %1536 = vmatprep.subr.mxu0 0.0
        %1537 = vmatpush1.msra.mxu0 %v1417
        %1538 = vmatprep.subr.mxu0 0.0
        %1539 = vmatpush1.msra.mxu0 %v1418
        %1540 = vmatprep.subr.mxu0 0.0
        %1541 = vmatpush1.msra.mxu0 %v1419
        %1542 = vmatprep.subr.mxu0 0.0
        %1543 = vmatpush1.msra.mxu0 %v1420
        %1544 = vmatprep.subr.mxu0 0.0
        %1545 = vmatpush1.msra.mxu0 %v1421
        %1546 = vmatprep.subr.mxu0 0.0
        %1547 = vmatpush1.msra.mxu0 %v1422
        %1548 = vmatprep.subr.mxu0 0.0
        %1549 = vmatpush1.msra.mxu0 %v1423
        %1550 = vmatprep.subr.mxu0 0.0
        %1551 = vmatpush1.msra.mxu0 0.0
        %1552 = vmatprep.subr.mxu0 0.0
        %1553 = vmatpush1.msra.mxu0 0.0
        %1554 = vmatprep.subr.mxu0 0.0
        %1555 = vmatpush1.msra.mxu0 0.0
        %1556 = vmatprep.subr.mxu0 0.0
        %1557 = vmatpush1.msra.mxu0 0.0
        %1558 = vmatprep.subr.mxu0 0.0
        %1559 = vmatpush1.msra.mxu0 0.0
        %1560 = vmatprep.subr.mxu0 0.0
        %1561 = vmatpush1.msra.mxu0 0.0
        %1562 = vmatprep.subr.mxu0 0.0
        %1563 = vmatpush1.msra.mxu0 0.0
        %1564 = vmatprep.subr.mxu0 0.0
        %1565 = vmatpush1.msra.mxu0 0.0
        %1566 = vmatprep.subr.mxu0 0.0
        %1567 = vmatpush1.msra.mxu0 0.0
        %1568 = vmatprep.subr.mxu0 0.0
        %1569 = vmatpush1.msra.mxu0 0.0
        %1570 = vmatprep.subr.mxu0 0.0
        %1571 = vmatpush1.msra.mxu0 0.0
        %1572 = vmatprep.subr.mxu0 0.0
        %1573 = vmatpush1.msra.mxu0 0.0
        %1574 = vmatprep.subr.mxu0 0.0
        %1575 = vmatpush1.msra.mxu0 0.0
        %1576 = vmatprep.subr.mxu0 0.0
        %1577 = vmatpush1.msra.mxu0 0.0
        %1578 = vmatprep.subr.mxu0 0.0
        %1579 = vmatpush1.msra.mxu0 0.0
        %1580 = vmatprep.subr.mxu0 0.0
        %1581 = vmatpush1.msra.mxu0 0.0
        %1582 = vmatprep.mubr.f32.mxu0 0.0
        %1583 = vmatmul.mubr.f32.gmra.mrb[0].mxu0 %v1405
        %v1584 = vpop.f32.mrb[0].mxu0
        %v1585 = vadd.f32 %v1510, %v1584
        %v1586 = vpop.f32.mrb[0].mxu0
        %1587 = vmatprep.mubr.f32.mxu0 0.0
        %1588 = vmatmul.mubr.f32.gmra.mrb[0].mxu0 %v1406
        %v1589 = vpop.f32.mrb[0].mxu0
        %v1590 = vadd.f32 %v1515, %v1589
        %v1591 = vpop.f32.mrb[0].mxu0
        %1592 = vdwg.mxu0
        %v1593 = vld [vmem:[#allocation2 + $0x2] sm:$0xff]
        %v1594 = vld [vmem:[#allocation2 + $0xa] sm:$0xff]
        %s1595 = scalar_lea.vmem [#allocation6], 1792
        %v1596 = vld [vmem:[%s1595] sm:$0xff]
        %v1597 = vld [vmem:[%s1595 + $0x8] sm:$0xff]
        %v1598 = vld [vmem:[%s1595 + $0x10] sm:$0xff]
        %v1599 = vld [vmem:[%s1595 + $0x18] sm:$0xff]
        %v1600 = vld [vmem:[%s1595 + $0x20] sm:$0xff]
        %v1601 = vld [vmem:[%s1595 + $0x28] sm:$0xff]
        %v1602 = vld [vmem:[%s1595 + $0x30] sm:$0xff]
        %v1603 = vld [vmem:[%s1595 + $0x38] sm:$0xff]
        %v1604 = vld [vmem:[%s1595 + $0x40] sm:$0xff]
        %v1605 = vld [vmem:[%s1595 + $0x48] sm:$0xff]
        %v1606 = vld [vmem:[%s1595 + $0x50] sm:$0xff]
        %v1607 = vld [vmem:[%s1595 + $0x58] sm:$0xff]
        %v1608 = vld [vmem:[%s1595 + $0x60] sm:$0xff]
        %v1609 = vld [vmem:[%s1595 + $0x68] sm:$0xff]
        %v1610 = vld [vmem:[%s1595 + $0x70] sm:$0xff]
        %v1611 = vld [vmem:[%s1595 + $0x78] sm:$0xff]
        %1612 = vmatprep.subr.mxu0 0.0
        %1613 = vmatpush1.msra.mxu0 %v1596
        %1614 = vmatprep.subr.mxu0 0.0
        %1615 = vmatpush1.msra.mxu0 %v1597
        %1616 = vmatprep.subr.mxu0 0.0
        %1617 = vmatpush1.msra.mxu0 %v1598
        %1618 = vmatprep.subr.mxu0 0.0
        %1619 = vmatpush1.msra.mxu0 %v1599
        %1620 = vmatprep.subr.mxu0 0.0
        %1621 = vmatpush1.msra.mxu0 %v1600
        %1622 = vmatprep.subr.mxu0 0.0
        %1623 = vmatpush1.msra.mxu0 %v1601
        %1624 = vmatprep.subr.mxu0 0.0
        %1625 = vmatpush1.msra.mxu0 %v1602
        %1626 = vmatprep.subr.mxu0 0.0
        %1627 = vmatpush1.msra.mxu0 %v1603
        %1628 = vmatprep.subr.mxu0 0.0
        %1629 = vmatpush1.msra.mxu0 %v1604
        %1630 = vmatprep.subr.mxu0 0.0
        %1631 = vmatpush1.msra.mxu0 %v1605
        %1632 = vmatprep.subr.mxu0 0.0
        %1633 = vmatpush1.msra.mxu0 %v1606
        %1634 = vmatprep.subr.mxu0 0.0
        %1635 = vmatpush1.msra.mxu0 %v1607
        %1636 = vmatprep.subr.mxu0 0.0
        %1637 = vmatpush1.msra.mxu0 %v1608
        %1638 = vmatprep.subr.mxu0 0.0
        %1639 = vmatpush1.msra.mxu0 %v1609
        %1640 = vmatprep.subr.mxu0 0.0
        %1641 = vmatpush1.msra.mxu0 %v1610
        %1642 = vmatprep.subr.mxu0 0.0
        %1643 = vmatpush1.msra.mxu0 %v1611
        %1644 = vmatprep.subr.mxu0 0.0
        %1645 = vmatpush1.msra.mxu0 0.0
        %1646 = vmatprep.subr.mxu0 0.0
        %1647 = vmatpush1.msra.mxu0 0.0
        %1648 = vmatprep.subr.mxu0 0.0
        %1649 = vmatpush1.msra.mxu0 0.0
        %1650 = vmatprep.subr.mxu0 0.0
        %1651 = vmatpush1.msra.mxu0 0.0
        %1652 = vmatprep.subr.mxu0 0.0
        %1653 = vmatpush1.msra.mxu0 0.0
        %1654 = vmatprep.subr.mxu0 0.0
        %1655 = vmatpush1.msra.mxu0 0.0
        %1656 = vmatprep.subr.mxu0 0.0
        %1657 = vmatpush1.msra.mxu0 0.0
        %1658 = vmatprep.subr.mxu0 0.0
        %1659 = vmatpush1.msra.mxu0 0.0
        %1660 = vmatprep.subr.mxu0 0.0
        %1661 = vmatpush1.msra.mxu0 0.0
        %1662 = vmatprep.subr.mxu0 0.0
        %1663 = vmatpush1.msra.mxu0 0.0
        %1664 = vmatprep.subr.mxu0 0.0
        %1665 = vmatpush1.msra.mxu0 0.0
        %1666 = vmatprep.subr.mxu0 0.0
        %1667 = vmatpush1.msra.mxu0 0.0
        %1668 = vmatprep.subr.mxu0 0.0
        %1669 = vmatpush1.msra.mxu0 0.0
        %1670 = vmatprep.subr.mxu0 0.0
        %1671 = vmatpush1.msra.mxu0 0.0
        %1672 = vmatprep.subr.mxu0 0.0
        %1673 = vmatpush1.msra.mxu0 0.0
        %1674 = vmatprep.subr.mxu0 0.0
        %1675 = vmatpush1.msra.mxu0 0.0
        %1676 = vmatprep.mubr.f32.mxu0 0.0
        %1677 = vmatmul.mubr.f32.gmra.mrb[0].mxu0 %v1593
        %v1678 = vpop.f32.mrb[0].mxu0
        %v1679 = vadd.f32 0.0, %v1678
        %v1680 = vpop.f32.mrb[0].mxu0
        %1681 = vmatprep.mubr.f32.mxu0 0.0
        %1682 = vmatmul.mubr.f32.gmra.mrb[0].mxu0 %v1594
        %v1683 = vpop.f32.mrb[0].mxu0
        %v1684 = vadd.f32 0.0, %v1683
        %v1685 = vpop.f32.mrb[0].mxu0
        %1686 = vdwg.mxu0
        %v1687 = vadd.f32 %v1585, %v1679
        %v1688 = vadd.f32 %v1590, %v1684
        %s1689 = scalar_lea.vmem %s2, 4
        %v1690 = vld [vmem:[%s1689] sm:$0x1]
        %v1692 = vlaneseq
        %v1693 = vshrl.u32 %v1692, 7
        %v1694 = vsub.s32 0, %v1693
        %v1695 = vrot.slane %v1690, %v1694
        %v1697 = vadd.f32 %v1687, %v1695
        %v1698 = vadd.f32 %v1688, %v1695
        %v1699 = vadd.f32 %v1697, %v207
        %v1700 = vadd.f32 %v1698, %v208
        %1701 = vst [vmem:[%s203] sm:$0xff] %v1699
        %1702 = vst [vmem:[%s203 + $0x8] sm:$0xff] %v1700
        %s1703 = sand.u32 %s97, 1
        %s1704 = scalar_lea.sflag [#allocation5], %s1703
        %s1705 = sand.u32 %s97, 1
        %s1706 = smul.addr %s1705, 16
        %s1707 = scalar_lea.vmem [#allocation8], %s1706
        // Predicated region
        $region41: #{tpu_custom_call.1} parent=31 // pred_check
          %p1708 = pneg %p107
        $region42: #{tpu_custom_call.1} parent=31 // pred_check_branch
          %1710 = sbr.rel (%p1708) target = $region44
        $region43: #{tpu_custom_call.1} parent=31 // pred_region
          %s1712 = ssub.s32 256, 256
          %1713 = vsyncadd %s1704, %s1712
          %s1714 = smul.addr %s21, 2
          %s1715 = smul.addr %s1714, 128
          %s1716 = scalar_lea.hbm %s3, %s1715
          %s1717 = sshll.u32 %s1707, 4
          %s1718 = int_to_ptr.vmem [resolvable:$true] %s1717
          %1723 = dma.vmem_to_hbm [thread:$0]  %s1718, 256, %s1716, %s1704, 128, 128, 8
        $region44: #{tpu_custom_call.1} parent=31 // pred_fallthru
          _
      $region32: #{tpu_custom_call.1} parent=5 // pred_fallthru
        _
      %p1724 = scmp.le.s32.totalorder 2, %s16
      // Predicated region
      $region45: #{tpu_custom_call.1} parent=5 // pred_check
        %p1725 = pneg %p1724
      $region46: #{tpu_custom_call.1} parent=5 // pred_check_branch
        %1727 = sbr.rel (%p1725) target = $region48
      $region47: #{tpu_custom_call.1} parent=5 // pred_region
        %s1728 = ssub.s32 %s16, 2
        // Predicated region
        $region49: #{tpu_custom_call.1} parent=47 // pred_check
          %p1729 = pneg %p113
        $region50: #{tpu_custom_call.1} parent=47 // pred_check_branch
          %1731 = sbr.rel (%p1729) target = $region52
        $region51: #{tpu_custom_call.1} parent=47 // pred_region
          %s1732 = sand.u32 %s98, 1
          %s1733 = scalar_lea.sflag [#allocation5], %s1732
          %s1734 = sand.u32 %s98, 1
          %s1735 = smul.addr %s1734, 16
          %s1736 = scalar_lea.vmem [#allocation8], %s1735
          %1737 = dma.done %s1733, 256
        $region52: #{tpu_custom_call.1} parent=47 // pred_fallthru
          _
      $region48: #{tpu_custom_call.1} parent=5 // pred_fallthru
        _
    $region6: #{tpu_custom_call.1} parent=1 // loop_footer
      %s20 = sadd.s32 1, %s16
    $region7: #{tpu_custom_call.1} parent=1 // loop_footer_branch
      %15 = sbr.rel target = $region3
    $region8: #{tpu_custom_call.1} parent=1 // loop_exit
      _
    %1738 = vsyncpa [#allocation4], 1
    %s1739 = scalar_lea.sflag [#allocation4], 1
    %1740 = vsyncpa %s1739, 1
    %1741 = vsyncpa [#allocation7], 1
    %1742 = vsyncpa [#allocation5], 1
    %s1743 = scalar_lea.sflag [#allocation5], 1
    %1744 = vsyncpa %s1743, 1

</llo_original>
